<compile_context>
chip_gen: v6e
topology: v6e:2x2x1
jax: 0.10.0
libtpu: 0.0.40
codegen_flags: <defaults>
</compile_context>

<pallas_src>
import jax
import jax.numpy as jnp
from jax.experimental import pallas as pl
from jax.experimental.pallas import tpu as pltpu


def _round_up(x, m):
    return (x + m - 1) // m * m


def link_predictor_kernel(xi_ref, xj_ref,
                          w1_ref, b1_ref,
                          w2_ref, b2_ref,
                          w3_ref, b3_ref,
                          o_ref):
    # Elementwise product of the two node embeddings.  Multiply in f32 (portable
    # across v5e which has no bf16 VPU), round to bf16 for the MXU operand.
    x = (xi_ref[...].astype(jnp.float32) *
         xj_ref[...].astype(jnp.float32)).astype(jnp.bfloat16)

    # Layer 1: Linear + ReLU (bf16 MXU operands, f32 accumulation).
    h = jnp.dot(x, w1_ref[...], preferred_element_type=jnp.float32) + b1_ref[...]
    h = jnp.maximum(h, 0.0).astype(jnp.bfloat16)
    # TODO(synk): dropout omitted — module evaluated with training=False, where
    # F.dropout is the identity.

    # Layer 2: Linear + ReLU.
    h = jnp.dot(h, w2_ref[...], preferred_element_type=jnp.float32) + b2_ref[...]
    h = jnp.maximum(h, 0.0).astype(jnp.bfloat16)

    # Output layer: Linear + sigmoid (tiny epilogue kept in f32).
    z = jnp.dot(h, w3_ref[...], preferred_element_type=jnp.float32) + b3_ref[...]
    o_ref[...] = jax.nn.sigmoid(z).astype(o_ref.dtype)


def link_predictor(x_i, x_j, params, *, tile_n=1024):
    """Fused LinkPredictor forward.

    params = (w1, b1, w2, b2, w3, b3) with w* already [in, out] and b* [1, out].
    tile_n: rows per grid step.  Sweep 1024-4096 for large N; the wrapper clips
    it so there are >= 2 grid steps when possible and pads N so the caller has
    no divisibility constraint.
    """
    w1, b1, w2, b2, w3, b3 = params
    N, C_in = x_i.shape
    C_out = w3.shape[1]

    # --- row-tile selection (big tiles amortize per-step overhead; keep >=2
    # grid steps when there is enough work so v7x's two TCs split evenly) -----
    tile = _round_up(max(tile_n, 128), 128)
    tile = min(tile, _round_up(max((N + 1) // 2, 1), 128))
    tile = max(tile, 128)

    N_pad = _round_up(N, tile)
    if N_pad != N:
        pad = ((0, N_pad - N), (0, 0))
        x_i = jnp.pad(x_i, pad)
        x_j = jnp.pad(x_j, pad)

    # bf16 storage for the HBM-dominant operands; biases stay f32 (added after
    # f32 accumulation).
    x_i = x_i.astype(jnp.bfloat16)
    x_j = x_j.astype(jnp.bfloat16)
    w1, w2, w3 = (w.astype(jnp.bfloat16) for w in (w1, w2, w3))
    b1, b2, b3 = (b.astype(jnp.float32) for b in (b1, b2, b3))

    grid = (N_pad // tile,)

    # x_i / x_j tiled over rows; weights & biases fully resident (constant block).
    row_spec = pl.BlockSpec((tile, C_in), lambda i: (i, 0))
    full = lambda shape: pl.BlockSpec(shape, lambda i: (0, 0))

    out = pl.pallas_call(
        link_predictor_kernel,
        out_shape=jax.ShapeDtypeStruct((N_pad, C_out), jnp.float32),
        grid_spec=pltpu.PrefetchScalarGridSpec(
            num_scalar_prefetch=0,
            grid=grid,
            in_specs=[
                row_spec, row_spec,
                full(w1.shape), full(b1.shape),
                full(w2.shape), full(b2.shape),
                full(w3.shape), full(b3.shape),
            ],
            out_specs=pl.BlockSpec((tile, C_out), lambda i: (i, 0)),
        ),
        compiler_params=pltpu.CompilerParams(
            dimension_semantics=("parallel",)),
    )(x_i, x_j, w1, b1, w2, b2, w3, b3)

    return out[:N]


def init_params(key, in_channels, hidden_channels, out_channels):
    """Deterministic init mimicking torch.nn.Linear (uniform +/- 1/sqrt(fan_in)).

    Returns weights already transposed to [in, out]."""
    dims = [(in_channels, hidden_channels),
            (hidden_channels, hidden_channels),
            (hidden_channels, out_channels)]
    params = []
    for (fan_in, fan_out) in dims:
        key, kw, kb = jax.random.split(key, 3)
        bound = 1.0 / jnp.sqrt(fan_in)
        w = jax.random.uniform(kw, (fan_in, fan_out), jnp.float32, -bound, bound)
        b = jax.random.uniform(kb, (1, fan_out), jnp.float32, -bound, bound)
        params += [w, b]
    return tuple(params)


def link_predictor_ref(x_i, x_j, params):
    """Pure-f32 reference (matches the PyTorch module at eval)."""
    w1, b1, w2, b2, w3, b3 = params
    x = x_i * x_j
    x = jax.nn.relu(x @ w1 + b1)
    x = jax.nn.relu(x @ w2 + b2)
    return jax.nn.sigmoid(x @ w3 + b3)


def link_predictor_ref_bf16(x_i, x_j, params):
    """Pure-JAX reference applying the same bf16 storage/operand rounding as the kernel."""
    w1, b1, w2, b2, w3, b3 = params
    bf = jnp.bfloat16
    xi = x_i.astype(bf).astype(jnp.float32)
    xj = x_j.astype(bf).astype(jnp.float32)
    x = (xi * xj).astype(bf)
    h = jnp.dot(x, w1.astype(bf), preferred_element_type=jnp.float32) + b1
    h = jax.nn.relu(h).astype(bf)
    h = jnp.dot(h, w2.astype(bf), preferred_element_type=jnp.float32) + b2
    h = jax.nn.relu(h).astype(bf)
    z = jnp.dot(h, w3.astype(bf), preferred_element_type=jnp.float32) + b3
    return jax.nn.sigmoid(z)


if __name__ == "__main__":
    # num_layers=3, out_channels=1; hidden=128 per the perf review (full MXU width).
    # N deliberately NOT a multiple of the tile to exercise the padding path.
    N, in_channels, hidden_channels, out_channels = 1000, 32, 128, 1

    key = jax.random.PRNGKey(0)
    k_xi, k_xj, k_p = jax.random.split(key, 3)
    x_i = jax.random.normal(k_xi, (N, in_channels), jnp.float32)
    x_j = jax.random.normal(k_xj, (N, in_channels), jnp.float32)
    params = init_params(k_p, in_channels, hidden_channels, out_channels)

    out = link_predictor(x_i, x_j, params, tile_n=1024)
    out = jax.block_until_ready(out)
    assert out.shape == (N, out_channels)

    # Mirror reference (same bf16 rounding as the kernel) -> tight tolerance.
    ref_bf16 = link_predictor_ref_bf16(x_i, x_j, params)
    assert jnp.allclose(out, ref_bf16, atol=2e-3, rtol=2e-3), "mismatch vs bf16 reference"

    # Full f32 reference -> loose tolerance bounding the bf16-storage error.
    ref_f32 = link_predictor_ref(x_i, x_j, params)
    assert jnp.allclose(out, ref_f32, atol=5e-2, rtol=5e-2), "mismatch vs f32 reference"

    print("KERNEL_OK")
</pallas_src>

<mosaic_0001>
module attributes {stable_mosaic.version = 11 : i64} {
  func.func @link_predictor_kernel(%arg0: i32, %arg1: memref<512x32xbf16, #tpu.memory_space<vmem>>, %arg2: memref<512x32xbf16, #tpu.memory_space<vmem>>, %arg3: memref<32x128xbf16, #tpu.memory_space<vmem>>, %arg4: memref<1x128xf32, #tpu.memory_space<vmem>>, %arg5: memref<128x128xbf16, #tpu.memory_space<vmem>>, %arg6: memref<1x128xf32, #tpu.memory_space<vmem>>, %arg7: memref<128x1xbf16, #tpu.memory_space<vmem>>, %arg8: memref<1x1xf32, #tpu.memory_space<vmem>>, %arg9: memref<512x1xf32, #tpu.memory_space<vmem>>) attributes {dimension_semantics = [#tpu.dimension_semantics<parallel>], iteration_bounds = array<i64: 2>, scalar_prefetch = 0 : i64, scratch_operands = 0 : i64, tpu.core_type = #tpu.core_type<tc>, window_params = [{transform_indices = @transform_0, window_bounds = array<i64: 512, 32>}, {transform_indices = @transform_1, window_bounds = array<i64: 512, 32>}, {pipeline_mode = #tpu.pipeline_mode<synchronous>, transform_indices = @transform_2, window_bounds = array<i64: 32, 128>}, {pipeline_mode = #tpu.pipeline_mode<synchronous>, transform_indices = @transform_3, window_bounds = array<i64: 1, 128>}, {pipeline_mode = #tpu.pipeline_mode<synchronous>, transform_indices = @transform_4, window_bounds = array<i64: 128, 128>}, {pipeline_mode = #tpu.pipeline_mode<synchronous>, transform_indices = @transform_5, window_bounds = array<i64: 1, 128>}, {pipeline_mode = #tpu.pipeline_mode<synchronous>, transform_indices = @transform_6, window_bounds = array<i64: 128, 1>}, {pipeline_mode = #tpu.pipeline_mode<synchronous>, transform_indices = @transform_7, window_bounds = array<i64: 1, 1>}, {transform_indices = @transform_8, window_bounds = array<i64: 512, 1>}]} {
    %c0 = arith.constant 0 : index
    %c0_0 = arith.constant 0 : index
    %0 = vector.load %arg1[%c0, %c0_0] : memref<512x32xbf16, #tpu.memory_space<vmem>>, vector<512x32xbf16>
    %1 = arith.extf %0 : vector<512x32xbf16> to vector<512x32xf32>
    %c0_1 = arith.constant 0 : index
    %c0_2 = arith.constant 0 : index
    %2 = vector.load %arg2[%c0_1, %c0_2] : memref<512x32xbf16, #tpu.memory_space<vmem>>, vector<512x32xbf16>
    %3 = arith.extf %2 : vector<512x32xbf16> to vector<512x32xf32>
    %4 = arith.mulf %1, %3 : vector<512x32xf32>
    %5 = arith.truncf %4 : vector<512x32xf32> to vector<512x32xbf16>
    %c0_3 = arith.constant 0 : index
    %c0_4 = arith.constant 0 : index
    %6 = vector.load %arg3[%c0_3, %c0_4] : memref<32x128xbf16, #tpu.memory_space<vmem>>, vector<32x128xbf16>
    %cst = arith.constant dense<0.000000e+00> : vector<512x128xf32>
    %7 = tpu.matmul %5, %6, %cst {dimension_numbers = #tpu.dot_dimension_numbers<[1], [0], [0], [1], [0, 0, 1, 1], [], []>} : vector<512x32xbf16>, vector<32x128xbf16>, vector<512x128xf32> -> vector<512x128xf32>
    %c0_5 = arith.constant 0 : index
    %c0_6 = arith.constant 0 : index
    %8 = vector.load %arg4[%c0_5, %c0_6] : memref<1x128xf32, #tpu.memory_space<vmem>>, vector<1x128xf32>
    %9 = vector.broadcast %8 : vector<1x128xf32> to vector<512x128xf32>
    %10 = arith.addf %7, %9 : vector<512x128xf32>
    %cst_7 = arith.constant 0.000000e+00 : f32
    %11 = vector.broadcast %cst_7 : f32 to vector<512x128xf32>
    %12 = arith.maximumf %10, %11 : vector<512x128xf32>
    %13 = arith.truncf %12 : vector<512x128xf32> to vector<512x128xbf16>
    %c0_8 = arith.constant 0 : index
    %c0_9 = arith.constant 0 : index
    %14 = vector.load %arg5[%c0_8, %c0_9] : memref<128x128xbf16, #tpu.memory_space<vmem>>, vector<128x128xbf16>
    %cst_10 = arith.constant dense<0.000000e+00> : vector<512x128xf32>
    %15 = tpu.matmul %13, %14, %cst_10 {dimension_numbers = #tpu.dot_dimension_numbers<[1], [0], [0], [1], [0, 0, 1, 1], [], []>} : vector<512x128xbf16>, vector<128x128xbf16>, vector<512x128xf32> -> vector<512x128xf32>
    %c0_11 = arith.constant 0 : index
    %c0_12 = arith.constant 0 : index
    %16 = vector.load %arg6[%c0_11, %c0_12] : memref<1x128xf32, #tpu.memory_space<vmem>>, vector<1x128xf32>
    %17 = vector.broadcast %16 : vector<1x128xf32> to vector<512x128xf32>
    %18 = arith.addf %15, %17 : vector<512x128xf32>
    %cst_13 = arith.constant 0.000000e+00 : f32
    %19 = vector.broadcast %cst_13 : f32 to vector<512x128xf32>
    %20 = arith.maximumf %18, %19 : vector<512x128xf32>
    %21 = arith.truncf %20 : vector<512x128xf32> to vector<512x128xbf16>
    %c0_14 = arith.constant 0 : index
    %c0_15 = arith.constant 0 : index
    %22 = vector.load %arg7[%c0_14, %c0_15] : memref<128x1xbf16, #tpu.memory_space<vmem>>, vector<128x1xbf16>
    %cst_16 = arith.constant dense<0.000000e+00> : vector<512x1xf32>
    %23 = tpu.matmul %21, %22, %cst_16 {dimension_numbers = #tpu.dot_dimension_numbers<[1], [0], [0], [1], [0, 0, 1, 1], [], []>} : vector<512x128xbf16>, vector<128x1xbf16>, vector<512x1xf32> -> vector<512x1xf32>
    %c0_17 = arith.constant 0 : index
    %c0_18 = arith.constant 0 : index
    %24 = vector.load %arg8[%c0_17, %c0_18] : memref<1x1xf32, #tpu.memory_space<vmem>>, vector<1x1xf32>
    %25 = vector.broadcast %24 : vector<1x1xf32> to vector<512x1xf32>
    %26 = arith.addf %23, %25 : vector<512x1xf32>
    %27 = arith.negf %26 : vector<512x1xf32>
    %28 = math.exp %27 : vector<512x1xf32>
    %cst_19 = arith.constant 1.000000e+00 : f32
    %29 = vector.broadcast %cst_19 : f32 to vector<512x1xf32>
    %30 = arith.addf %29, %28 : vector<512x1xf32>
    %31 = arith.divf %29, %30 : vector<512x1xf32>
    %c0_20 = arith.constant 0 : index
    %c0_21 = arith.constant 0 : index
    %32 = vector.load %arg9[%c0_20, %c0_21] : memref<512x1xf32, #tpu.memory_space<vmem>>, vector<512x1xf32>
    tpu.vector_store %arg9[%c0_20, %c0_21], %31 {strides = array<i32>} : memref<512x1xf32, #tpu.memory_space<vmem>>, vector<512x1xf32>,
    return
  }
  func.func @transform_0(%arg0: i32) -> (i32, i32) {
    %c0_i32 = arith.constant 0 : i32
    %c0_i32_0 = arith.constant 0 : i32
    return %arg0, %c0_i32 : i32, i32
  }
  func.func @transform_1(%arg0: i32) -> (i32, i32) {
    %c0_i32 = arith.constant 0 : i32
    %c0_i32_0 = arith.constant 0 : i32
    return %arg0, %c0_i32 : i32, i32
  }
  func.func @transform_2(%arg0: i32) -> (i32, i32) {
    %c0_i32 = arith.constant 0 : i32
    %c0_i32_0 = arith.constant 0 : i32
    %c0_i32_1 = arith.constant 0 : i32
    return %c0_i32, %c0_i32_0 : i32, i32
  }
  func.func @transform_3(%arg0: i32) -> (i32, i32) {
    %c0_i32 = arith.constant 0 : i32
    %c0_i32_0 = arith.constant 0 : i32
    %c0_i32_1 = arith.constant 0 : i32
    return %c0_i32, %c0_i32_0 : i32, i32
  }
  func.func @transform_4(%arg0: i32) -> (i32, i32) {
    %c0_i32 = arith.constant 0 : i32
    %c0_i32_0 = arith.constant 0 : i32
    %c0_i32_1 = arith.constant 0 : i32
    return %c0_i32, %c0_i32_0 : i32, i32
  }
  func.func @transform_5(%arg0: i32) -> (i32, i32) {
    %c0_i32 = arith.constant 0 : i32
    %c0_i32_0 = arith.constant 0 : i32
    %c0_i32_1 = arith.constant 0 : i32
    return %c0_i32, %c0_i32_0 : i32, i32
  }
  func.func @transform_6(%arg0: i32) -> (i32, i32) {
    %c0_i32 = arith.constant 0 : i32
    %c0_i32_0 = arith.constant 0 : i32
    %c0_i32_1 = arith.constant 0 : i32
    return %c0_i32, %c0_i32_0 : i32, i32
  }
  func.func @transform_7(%arg0: i32) -> (i32, i32) {
    %c0_i32 = arith.constant 0 : i32
    %c0_i32_0 = arith.constant 0 : i32
    %c0_i32_1 = arith.constant 0 : i32
    return %c0_i32, %c0_i32_0 : i32, i32
  }
  func.func @transform_8(%arg0: i32) -> (i32, i32) {
    %c0_i32 = arith.constant 0 : i32
    %c0_i32_0 = arith.constant 0 : i32
    return %arg0, %c0_i32 : i32, i32
  }
}

</mosaic_0001>

<llo_original>
// kernel: tpu_custom_call.1
$region0: #{tpu_custom_call.1}
  #allocation0 [shape = 'u32[]', space=smem, size = 0x4, offset = 0x4, fixed_abs, tag = 'smem constant byte address 0x4 - core index']
  #allocation1 [shape = 'u32[144,128]{1,0:T(1,128)}', space=vmem, size = 0x12000, scoped, tag = 'internal scratch']
  #allocation2 [shape = 'f32[1,1]{1,0:T(1,128)S(1)}', space=vmem, size = 0x200, scoped, tag = 'scoped memory for tpu_custom_call.1']
  %s0 = inlined_call_operand.vmem [shape: bf16[1024,32], index: 0, kind: input, shape index: {}]
  %s1 = inlined_call_operand.vmem [shape: bf16[1024,32], index: 1, kind: input, shape index: {}]
  %s2 = inlined_call_operand.vmem [shape: bf16[32,128], index: 2, kind: input, shape index: {}]
  %s3 = inlined_call_operand.vmem [shape: f32[1,128], index: 3, kind: input, shape index: {}]
  %s4 = inlined_call_operand.vmem [shape: bf16[128,128], index: 4, kind: input, shape index: {}]
  %s5 = inlined_call_operand.vmem [shape: f32[1,128], index: 5, kind: input, shape index: {}]
  %s6 = inlined_call_operand.vmem [shape: bf16[128,1], index: 6, kind: input, shape index: {}]
  %s7 = inlined_call_operand.<no memory space> [shape: f32[1,1], index: 7, kind: input, shape index: {}]
  %s8 = inlined_call_operand.vmem [shape: f32[1024,1], index: 8, kind: output, shape index: {}]
  %s9 = sld [smem:[#allocation0]]
  $region65: #{tpu_custom_call.1} parent=0
    _
  %s11 = ssub.s32 1, %s9
  %s12 = scalar_select 0, %s11, %s9
  %v13 = vstv %s7
  %14 = vst [vmem:[#allocation2] sm:$0x1] %v13
  loop: start=0, step=1, limit=4
  $region2: #{tpu_custom_call.1} parent=0 // loop_pre_header
    _
  $region3: #{tpu_custom_call.1} parent=0 // loop_header
    %s16 = sphi 0, %s20
    %p17 = scmp.ge.s32.totalorder %s16, 4
    %s26 = sphi 0, %s28
    %s29 = sphi 0, %s26
    %s30 = sphi 0, %s29
    %s46 = sphi 0, %s30
    %s52 = sphi 0, %s54
    %s55 = sphi 0, %s52
    %s56 = sphi 0, %s55
    %s72 = sphi 0, %s56
    %s76 = sphi 0, %s76
    %s78 = sphi 0, %s76
    %s79 = sphi 0, %s78
    %s93 = sphi 0, %s79
    %s97 = sphi 0, %s97
    %s99 = sphi 0, %s97
    %s100 = sphi 0, %s99
    %s114 = sphi 0, %s100
    %s118 = sphi 0, %s118
    %s120 = sphi 0, %s118
    %s121 = sphi 0, %s120
    %s135 = sphi 0, %s121
    %s139 = sphi 0, %s139
    %s141 = sphi 0, %s139
    %s142 = sphi 0, %s141
    %s156 = sphi 0, %s142
    %s160 = sphi 0, %s160
    %s162 = sphi 0, %s160
    %s163 = sphi 0, %s162
    %s177 = sphi 0, %s163
    %s181 = sphi 0, %s181
    %s183 = sphi 0, %s181
    %s184 = sphi 0, %s183
    %s198 = sphi 0, %s184
    %s204 = sphi 0, %s206
    %s207 = sphi 0, %s204
    %s208 = sphi 0, %s207
    %s224 = sphi 0, %s208
  $region4: #{tpu_custom_call.1} parent=0 // loop_header_branch
    %19 = sbr.rel (%p17) target = $region8
  $region5: #{tpu_custom_call.1} parent=0 // loop_body
    %s21 = ssub.s32 %s16, 1
    %s22 = ssub.s32 %s16, 2
    %s23 = sadd.s32 %s16, 1
    %s24 = ssub.s32 %s16, %s23
    %p25 = scmp.eq.s32.totalorder %s24, 0
    %s27 = sadd.s32 %s26, 1
    %s28 = scalar_select %p25, %s26, %s27
    %p31 = pneg %p25
    %p32 = scmp.eq.s32.totalorder %s16, 1
    %p33 = por %p31, %p32
    %p34 = scmp.ne.s32.totalorder %s26, %s29
    %p35 = scmp.eq.s32.totalorder %s16, 0
    %p36 = por %p34, %p35
    %p37 = scmp.ne.s32.totalorder %s26, %s29
    %p38 = scmp.eq.s32.totalorder %s21, 1
    %p39 = por %p37, %p38
    %p40 = scmp.ne.s32.totalorder %s29, %s30
    %p41 = scmp.eq.s32.totalorder %s21, 0
    %p42 = por %p40, %p41
    %p43 = scmp.ne.s32.totalorder %s29, %s30
    %p44 = scmp.eq.s32.totalorder %s22, 1
    %p45 = por %p43, %p44
    %p47 = scmp.ne.s32.totalorder %s30, %s46
    %p48 = scmp.eq.s32.totalorder %s22, 0
    %p49 = por %p47, %p48
    %s50 = ssub.s32 %s16, %s23
    %p51 = scmp.eq.s32.totalorder %s50, 0
    %s53 = sadd.s32 %s52, 1
    %s54 = scalar_select %p51, %s52, %s53
    %p57 = pneg %p51
    %p58 = scmp.eq.s32.totalorder %s16, 1
    %p59 = por %p57, %p58
    %p60 = scmp.ne.s32.totalorder %s52, %s55
    %p61 = scmp.eq.s32.totalorder %s16, 0
    %p62 = por %p60, %p61
    %p63 = scmp.ne.s32.totalorder %s52, %s55
    %p64 = scmp.eq.s32.totalorder %s21, 1
    %p65 = por %p63, %p64
    %p66 = scmp.ne.s32.totalorder %s55, %s56
    %p67 = scmp.eq.s32.totalorder %s21, 0
    %p68 = por %p66, %p67
    %p69 = scmp.ne.s32.totalorder %s55, %s56
    %p70 = scmp.eq.s32.totalorder %s22, 1
    %p71 = por %p69, %p70
    %p73 = scmp.ne.s32.totalorder %s56, %s72
    %p74 = scmp.eq.s32.totalorder %s22, 0
    %p75 = por %p73, %p74
    %s77 = sadd.s32 %s76, 1
    %p80 = scmp.eq.s32.totalorder %s16, 1
    %p81 = scmp.ne.s32.totalorder %s76, %s78
    %p82 = scmp.eq.s32.totalorder %s16, 0
    %p83 = por %p81, %p82
    %p84 = scmp.ne.s32.totalorder %s76, %s78
    %p85 = scmp.eq.s32.totalorder %s21, 1
    %p86 = por %p84, %p85
    %p87 = scmp.ne.s32.totalorder %s78, %s79
    %p88 = scmp.eq.s32.totalorder %s21, 0
    %p89 = por %p87, %p88
    %p90 = scmp.ne.s32.totalorder %s78, %s79
    %p91 = scmp.eq.s32.totalorder %s22, 1
    %p92 = por %p90, %p91
    %p94 = scmp.ne.s32.totalorder %s79, %s93
    %p95 = scmp.eq.s32.totalorder %s22, 0
    %p96 = por %p94, %p95
    %s98 = sadd.s32 %s97, 1
    %p101 = scmp.eq.s32.totalorder %s16, 1
    %p102 = scmp.ne.s32.totalorder %s97, %s99
    %p103 = scmp.eq.s32.totalorder %s16, 0
    %p104 = por %p102, %p103
    %p105 = scmp.ne.s32.totalorder %s97, %s99
    %p106 = scmp.eq.s32.totalorder %s21, 1
    %p107 = por %p105, %p106
    %p108 = scmp.ne.s32.totalorder %s99, %s100
    %p109 = scmp.eq.s32.totalorder %s21, 0
    %p110 = por %p108, %p109
    %p111 = scmp.ne.s32.totalorder %s99, %s100
    %p112 = scmp.eq.s32.totalorder %s22, 1
    %p113 = por %p111, %p112
    %p115 = scmp.ne.s32.totalorder %s100, %s114
    %p116 = scmp.eq.s32.totalorder %s22, 0
    %p117 = por %p115, %p116
    %s119 = sadd.s32 %s118, 1
    %p122 = scmp.eq.s32.totalorder %s16, 1
    %p123 = scmp.ne.s32.totalorder %s118, %s120
    %p124 = scmp.eq.s32.totalorder %s16, 0
    %p125 = por %p123, %p124
    %p126 = scmp.ne.s32.totalorder %s118, %s120
    %p127 = scmp.eq.s32.totalorder %s21, 1
    %p128 = por %p126, %p127
    %p129 = scmp.ne.s32.totalorder %s120, %s121
    %p130 = scmp.eq.s32.totalorder %s21, 0
    %p131 = por %p129, %p130
    %p132 = scmp.ne.s32.totalorder %s120, %s121
    %p133 = scmp.eq.s32.totalorder %s22, 1
    %p134 = por %p132, %p133
    %p136 = scmp.ne.s32.totalorder %s121, %s135
    %p137 = scmp.eq.s32.totalorder %s22, 0
    %p138 = por %p136, %p137
    %s140 = sadd.s32 %s139, 1
    %p143 = scmp.eq.s32.totalorder %s16, 1
    %p144 = scmp.ne.s32.totalorder %s139, %s141
    %p145 = scmp.eq.s32.totalorder %s16, 0
    %p146 = por %p144, %p145
    %p147 = scmp.ne.s32.totalorder %s139, %s141
    %p148 = scmp.eq.s32.totalorder %s21, 1
    %p149 = por %p147, %p148
    %p150 = scmp.ne.s32.totalorder %s141, %s142
    %p151 = scmp.eq.s32.totalorder %s21, 0
    %p152 = por %p150, %p151
    %p153 = scmp.ne.s32.totalorder %s141, %s142
    %p154 = scmp.eq.s32.totalorder %s22, 1
    %p155 = por %p153, %p154
    %p157 = scmp.ne.s32.totalorder %s142, %s156
    %p158 = scmp.eq.s32.totalorder %s22, 0
    %p159 = por %p157, %p158
    %s161 = sadd.s32 %s160, 1
    %p164 = scmp.eq.s32.totalorder %s16, 1
    %p165 = scmp.ne.s32.totalorder %s160, %s162
    %p166 = scmp.eq.s32.totalorder %s16, 0
    %p167 = por %p165, %p166
    %p168 = scmp.ne.s32.totalorder %s160, %s162
    %p169 = scmp.eq.s32.totalorder %s21, 1
    %p170 = por %p168, %p169
    %p171 = scmp.ne.s32.totalorder %s162, %s163
    %p172 = scmp.eq.s32.totalorder %s21, 0
    %p173 = por %p171, %p172
    %p174 = scmp.ne.s32.totalorder %s162, %s163
    %p175 = scmp.eq.s32.totalorder %s22, 1
    %p176 = por %p174, %p175
    %p178 = scmp.ne.s32.totalorder %s163, %s177
    %p179 = scmp.eq.s32.totalorder %s22, 0
    %p180 = por %p178, %p179
    %s182 = sadd.s32 %s181, 1
    %p185 = scmp.eq.s32.totalorder %s16, 1
    %p186 = scmp.ne.s32.totalorder %s181, %s183
    %p187 = scmp.eq.s32.totalorder %s16, 0
    %p188 = por %p186, %p187
    %p189 = scmp.ne.s32.totalorder %s181, %s183
    %p190 = scmp.eq.s32.totalorder %s21, 1
    %p191 = por %p189, %p190
    %p192 = scmp.ne.s32.totalorder %s183, %s184
    %p193 = scmp.eq.s32.totalorder %s21, 0
    %p194 = por %p192, %p193
    %p195 = scmp.ne.s32.totalorder %s183, %s184
    %p196 = scmp.eq.s32.totalorder %s22, 1
    %p197 = por %p195, %p196
    %p199 = scmp.ne.s32.totalorder %s184, %s198
    %p200 = scmp.eq.s32.totalorder %s22, 0
    %p201 = por %p199, %p200
    %s202 = ssub.s32 %s16, %s23
    %p203 = scmp.eq.s32.totalorder %s202, 0
    %s205 = sadd.s32 %s204, 1
    %s206 = scalar_select %p203, %s204, %s205
    %p209 = pneg %p203
    %p210 = scmp.eq.s32.totalorder %s16, 1
    %p211 = por %p209, %p210
    %p212 = scmp.ne.s32.totalorder %s204, %s207
    %p213 = scmp.eq.s32.totalorder %s16, 0
    %p214 = por %p212, %p213
    %p215 = scmp.ne.s32.totalorder %s204, %s207
    %p216 = scmp.eq.s32.totalorder %s21, 1
    %p217 = por %p215, %p216
    %p218 = scmp.ne.s32.totalorder %s207, %s208
    %p219 = scmp.eq.s32.totalorder %s21, 0
    %p220 = por %p218, %p219
    %p221 = scmp.ne.s32.totalorder %s207, %s208
    %p222 = scmp.eq.s32.totalorder %s22, 1
    %p223 = por %p221, %p222
    %p225 = scmp.ne.s32.totalorder %s208, %s224
    %p226 = scmp.eq.s32.totalorder %s22, 0
    %p227 = por %p225, %p226
    %p228 = scmp.le.s32.totalorder 1, %s16
    %p229 = scmp.lt.s32.totalorder %s16, 3
    %p230 = pnand %p228, %p229
    %p231 = pneg %p230
    // Predicated region
    $region9: #{tpu_custom_call.1} parent=5 // pred_check
      _
    $region10: #{tpu_custom_call.1} parent=5 // pred_check_branch
      %233 = sbr.rel (%p230) target = $region12
    $region11: #{tpu_custom_call.1} parent=5 // pred_region
      %s234 = ssub.s32 %s16, 1
      // Predicated region
      $region13: #{tpu_custom_call.1} parent=11 // pred_check
        %p235 = pneg %p89
      $region14: #{tpu_custom_call.1} parent=11 // pred_check_branch
        %237 = sbr.rel (%p235) target = $region16
      $region15: #{tpu_custom_call.1} parent=11 // pred_region
        _
      $region16: #{tpu_custom_call.1} parent=11 // pred_fallthru
        _
      // Predicated region
      $region17: #{tpu_custom_call.1} parent=11 // pred_check
        %p238 = pneg %p110
      $region18: #{tpu_custom_call.1} parent=11 // pred_check_branch
        %240 = sbr.rel (%p238) target = $region20
      $region19: #{tpu_custom_call.1} parent=11 // pred_region
        _
      $region20: #{tpu_custom_call.1} parent=11 // pred_fallthru
        _
      // Predicated region
      $region21: #{tpu_custom_call.1} parent=11 // pred_check
        %p241 = pneg %p131
      $region22: #{tpu_custom_call.1} parent=11 // pred_check_branch
        %243 = sbr.rel (%p241) target = $region24
      $region23: #{tpu_custom_call.1} parent=11 // pred_region
        _
      $region24: #{tpu_custom_call.1} parent=11 // pred_fallthru
        _
      // Predicated region
      $region25: #{tpu_custom_call.1} parent=11 // pred_check
        %p244 = pneg %p152
      $region26: #{tpu_custom_call.1} parent=11 // pred_check_branch
        %246 = sbr.rel (%p244) target = $region28
      $region27: #{tpu_custom_call.1} parent=11 // pred_region
        _
      $region28: #{tpu_custom_call.1} parent=11 // pred_fallthru
        _
      // Predicated region
      $region29: #{tpu_custom_call.1} parent=11 // pred_check
        %p247 = pneg %p173
      $region30: #{tpu_custom_call.1} parent=11 // pred_check_branch
        %249 = sbr.rel (%p247) target = $region32
      $region31: #{tpu_custom_call.1} parent=11 // pred_region
        _
      $region32: #{tpu_custom_call.1} parent=11 // pred_fallthru
        _
      // Predicated region
      $region33: #{tpu_custom_call.1} parent=11 // pred_check
        %p250 = pneg %p194
      $region34: #{tpu_custom_call.1} parent=11 // pred_check_branch
        %252 = sbr.rel (%p250) target = $region36
      $region35: #{tpu_custom_call.1} parent=11 // pred_region
        _
      $region36: #{tpu_custom_call.1} parent=11 // pred_fallthru
        _
    $region12: #{tpu_custom_call.1} parent=5 // pred_fallthru
      _
    %p253 = scmp.lt.s32.totalorder %s16, 2
    // Predicated region
    $region37: #{tpu_custom_call.1} parent=5 // pred_check
      %p254 = pneg %p253
    $region38: #{tpu_custom_call.1} parent=5 // pred_check_branch
      %256 = sbr.rel (%p254) target = $region40
    $region39: #{tpu_custom_call.1} parent=5 // pred_region
      // Predicated region
      $region41: #{tpu_custom_call.1} parent=39 // pred_check
        %p257 = pneg %p36
      $region42: #{tpu_custom_call.1} parent=39 // pred_check_branch
        %259 = sbr.rel (%p257) target = $region44
      $region43: #{tpu_custom_call.1} parent=39 // pred_region
        %s260 = smul.u32 64, %s16
        %p261 = scmp.lt.s32.totalorder %s260, 127
        %s262 = scalar_select %p261, %s260, 127
        %s263 = smul.addr %s262, 4
        %s264 = scalar_lea.vmem %s0, %s263
        %s265 = smul.u32 64, %s16
      $region44: #{tpu_custom_call.1} parent=39 // pred_fallthru
        _
      // Predicated region
      $region45: #{tpu_custom_call.1} parent=39 // pred_check
        %p266 = pneg %p62
      $region46: #{tpu_custom_call.1} parent=39 // pred_check_branch
        %268 = sbr.rel (%p266) target = $region48
      $region47: #{tpu_custom_call.1} parent=39 // pred_region
        %s269 = smul.u32 64, %s16
        %p270 = scmp.lt.s32.totalorder %s269, 127
        %s271 = scalar_select %p270, %s269, 127
        %s272 = smul.addr %s271, 4
        %s273 = scalar_lea.vmem %s1, %s272
        %s274 = smul.u32 64, %s16
      $region48: #{tpu_custom_call.1} parent=39 // pred_fallthru
        _
    $region40: #{tpu_custom_call.1} parent=5 // pred_fallthru
      _
    %p275 = scmp.le.s32.totalorder 1, %s16
    %p276 = scmp.lt.s32.totalorder %s16, 3
    %p277 = pnand %p275, %p276
    %p278 = pneg %p277
    // Predicated region
    $region49: #{tpu_custom_call.1} parent=5 // pred_check
      _
    $region50: #{tpu_custom_call.1} parent=5 // pred_check_branch
      %280 = sbr.rel (%p277) target = $region52
    $region51: #{tpu_custom_call.1} parent=5 // pred_region
      %s281 = ssub.s32 %s16, 1
      %s282 = smul.u32 64, %s21
      %p283 = scmp.lt.s32.totalorder %s282, 127
      %s284 = scalar_select %p283, %s282, 127
      %s285 = smul.addr %s284, 4
      %s286 = scalar_lea.vmem %s0, %s285
      %p287 = pneg %p42
      %p288 = pneg %p39
      %s289 = smul.u32 64, %s21
      %p290 = scmp.lt.s32.totalorder %s289, 127
      %s291 = scalar_select %p290, %s289, 127
      %s292 = smul.addr %s291, 4
      %s293 = scalar_lea.vmem %s1, %s292
      %p294 = pneg %p68
      %p295 = pneg %p65
      %p296 = pneg %p89
      %p297 = pneg %p86
      %p298 = pneg %p110
      %p299 = pneg %p107
      %p300 = pneg %p131
      %p301 = pneg %p128
      %p302 = pneg %p152
      %p303 = pneg %p149
      %p304 = pneg %p173
      %p305 = pneg %p170
      %p306 = pneg %p194
      %p307 = pneg %p191
      %p308 = pneg %p220
      %p309 = pneg %p217
      %s310 = smul.u32 64, %s21
      %p311 = scmp.lt.s32.totalorder %s310, 127
      %s312 = scalar_select %p311, %s310, 127
      %s313 = smul.addr %s312, 8
      %s314 = scalar_lea.vmem %s8, %s313
      %s315 = smul.u32 64, %s21
      %p316 = scmp.lt.s32.totalorder %s315, 127
      %s317 = scalar_select %p316, %s315, 127
      %s318 = smul.addr %s317, 4
      %s319 = scalar_lea.vmem %s0, %s318
      %s320 = smul.u32 64, %s21
      %s321 = smul.u32 64, %s21
      %p322 = scmp.lt.s32.totalorder %s321, 127
      %s323 = scalar_select %p322, %s321, 127
      %s324 = smul.addr %s323, 4
      %s325 = scalar_lea.vmem %s1, %s324
      %s326 = smul.u32 64, %s21
      %s327 = smul.u32 64, %s21
      %p328 = scmp.lt.s32.totalorder %s327, 127
      %s329 = scalar_select %p328, %s327, 127
      %s330 = smul.addr %s329, 8
      %s331 = scalar_lea.vmem %s8, %s330
      %s332 = smul.u32 64, %s21
      %v334 = vld [vmem:[%s319] sm:$0xf]
      %v335 = vld [vmem:[%s319 + $0x4] sm:$0xf]
      %v336 = vld [vmem:[%s319 + $0x8] sm:$0xf]
      %v337 = vld [vmem:[%s319 + $0xc] sm:$0xf]
      %v338 = vld [vmem:[%s319 + $0x10] sm:$0xf]
      %v339 = vld [vmem:[%s319 + $0x14] sm:$0xf]
      %v340 = vld [vmem:[%s319 + $0x18] sm:$0xf]
      %v341 = vld [vmem:[%s319 + $0x1c] sm:$0xf]
      %v342 = vld [vmem:[%s319 + $0x20] sm:$0xf]
      %v343 = vld [vmem:[%s319 + $0x24] sm:$0xf]
      %v344 = vld [vmem:[%s319 + $0x28] sm:$0xf]
      %v345 = vld [vmem:[%s319 + $0x2c] sm:$0xf]
      %v346 = vld [vmem:[%s319 + $0x30] sm:$0xf]
      %v347 = vld [vmem:[%s319 + $0x34] sm:$0xf]
      %v348 = vld [vmem:[%s319 + $0x38] sm:$0xf]
      %v349 = vld [vmem:[%s319 + $0x3c] sm:$0xf]
      %v350 = vld [vmem:[%s319 + $0x40] sm:$0xf]
      %v351 = vld [vmem:[%s319 + $0x44] sm:$0xf]
      %v352 = vld [vmem:[%s319 + $0x48] sm:$0xf]
      %v353 = vld [vmem:[%s319 + $0x4c] sm:$0xf]
      %v354 = vld [vmem:[%s319 + $0x50] sm:$0xf]
      %v355 = vld [vmem:[%s319 + $0x54] sm:$0xf]
      %v356 = vld [vmem:[%s319 + $0x58] sm:$0xf]
      %v357 = vld [vmem:[%s319 + $0x5c] sm:$0xf]
      %v358 = vld [vmem:[%s319 + $0x60] sm:$0xf]
      %v359 = vld [vmem:[%s319 + $0x64] sm:$0xf]
      %v360 = vld [vmem:[%s319 + $0x68] sm:$0xf]
      %v361 = vld [vmem:[%s319 + $0x6c] sm:$0xf]
      %v362 = vld [vmem:[%s319 + $0x70] sm:$0xf]
      %v363 = vld [vmem:[%s319 + $0x74] sm:$0xf]
      %v364 = vld [vmem:[%s319 + $0x78] sm:$0xf]
      %v365 = vld [vmem:[%s319 + $0x7c] sm:$0xf]
      %v366 = vld [vmem:[%s319 + $0x80] sm:$0xf]
      %v367 = vld [vmem:[%s319 + $0x84] sm:$0xf]
      %v368 = vld [vmem:[%s319 + $0x88] sm:$0xf]
      %v369 = vld [vmem:[%s319 + $0x8c] sm:$0xf]
      %v370 = vld [vmem:[%s319 + $0x90] sm:$0xf]
      %v371 = vld [vmem:[%s319 + $0x94] sm:$0xf]
      %v372 = vld [vmem:[%s319 + $0x98] sm:$0xf]
      %v373 = vld [vmem:[%s319 + $0x9c] sm:$0xf]
      %v374 = vld [vmem:[%s319 + $0xa0] sm:$0xf]
      %v375 = vld [vmem:[%s319 + $0xa4] sm:$0xf]
      %v376 = vld [vmem:[%s319 + $0xa8] sm:$0xf]
      %v377 = vld [vmem:[%s319 + $0xac] sm:$0xf]
      %v378 = vld [vmem:[%s319 + $0xb0] sm:$0xf]
      %v379 = vld [vmem:[%s319 + $0xb4] sm:$0xf]
      %v380 = vld [vmem:[%s319 + $0xb8] sm:$0xf]
      %v381 = vld [vmem:[%s319 + $0xbc] sm:$0xf]
      %v382 = vld [vmem:[%s319 + $0xc0] sm:$0xf]
      %v383 = vld [vmem:[%s319 + $0xc4] sm:$0xf]
      %v384 = vld [vmem:[%s319 + $0xc8] sm:$0xf]
      %v385 = vld [vmem:[%s319 + $0xcc] sm:$0xf]
      %v386 = vld [vmem:[%s319 + $0xd0] sm:$0xf]
      %v387 = vld [vmem:[%s319 + $0xd4] sm:$0xf]
      %v388 = vld [vmem:[%s319 + $0xd8] sm:$0xf]
      %v389 = vld [vmem:[%s319 + $0xdc] sm:$0xf]
      %v390 = vld [vmem:[%s319 + $0xe0] sm:$0xf]
      %v391 = vld [vmem:[%s319 + $0xe4] sm:$0xf]
      %v392 = vld [vmem:[%s319 + $0xe8] sm:$0xf]
      %v393 = vld [vmem:[%s319 + $0xec] sm:$0xf]
      %v394 = vld [vmem:[%s319 + $0xf0] sm:$0xf]
      %v395 = vld [vmem:[%s319 + $0xf4] sm:$0xf]
      %v396 = vld [vmem:[%s319 + $0xf8] sm:$0xf]
      %v397 = vld [vmem:[%s319 + $0xfc] sm:$0xf]
      %v398 = vunpack.c.l.bf16 %v334
      %v399 = vunpack.c.l.bf16 %v335
      %v400 = vunpack.c.l.bf16 %v336
      %v401 = vunpack.c.l.bf16 %v337
      %v402 = vunpack.c.l.bf16 %v338
      %v403 = vunpack.c.l.bf16 %v339
      %v404 = vunpack.c.l.bf16 %v340
      %v405 = vunpack.c.l.bf16 %v341
      %v406 = vunpack.c.l.bf16 %v342
      %v407 = vunpack.c.l.bf16 %v343
      %v408 = vunpack.c.l.bf16 %v344
      %v409 = vunpack.c.l.bf16 %v345
      %v410 = vunpack.c.l.bf16 %v346
      %v411 = vunpack.c.l.bf16 %v347
      %v412 = vunpack.c.l.bf16 %v348
      %v413 = vunpack.c.l.bf16 %v349
      %v414 = vunpack.c.l.bf16 %v350
      %v415 = vunpack.c.l.bf16 %v351
      %v416 = vunpack.c.l.bf16 %v352
      %v417 = vunpack.c.l.bf16 %v353
      %v418 = vunpack.c.l.bf16 %v354
      %v419 = vunpack.c.l.bf16 %v355
      %v420 = vunpack.c.l.bf16 %v356
      %v421 = vunpack.c.l.bf16 %v357
      %v422 = vunpack.c.l.bf16 %v358
      %v423 = vunpack.c.l.bf16 %v359
      %v424 = vunpack.c.l.bf16 %v360
      %v425 = vunpack.c.l.bf16 %v361
      %v426 = vunpack.c.l.bf16 %v362
      %v427 = vunpack.c.l.bf16 %v363
      %v428 = vunpack.c.l.bf16 %v364
      %v429 = vunpack.c.l.bf16 %v365
      %v430 = vunpack.c.l.bf16 %v366
      %v431 = vunpack.c.l.bf16 %v367
      %v432 = vunpack.c.l.bf16 %v368
      %v433 = vunpack.c.l.bf16 %v369
      %v434 = vunpack.c.l.bf16 %v370
      %v435 = vunpack.c.l.bf16 %v371
      %v436 = vunpack.c.l.bf16 %v372
      %v437 = vunpack.c.l.bf16 %v373
      %v438 = vunpack.c.l.bf16 %v374
      %v439 = vunpack.c.l.bf16 %v375
      %v440 = vunpack.c.l.bf16 %v376
      %v441 = vunpack.c.l.bf16 %v377
      %v442 = vunpack.c.l.bf16 %v378
      %v443 = vunpack.c.l.bf16 %v379
      %v444 = vunpack.c.l.bf16 %v380
      %v445 = vunpack.c.l.bf16 %v381
      %v446 = vunpack.c.l.bf16 %v382
      %v447 = vunpack.c.l.bf16 %v383
      %v448 = vunpack.c.l.bf16 %v384
      %v449 = vunpack.c.l.bf16 %v385
      %v450 = vunpack.c.l.bf16 %v386
      %v451 = vunpack.c.l.bf16 %v387
      %v452 = vunpack.c.l.bf16 %v388
      %v453 = vunpack.c.l.bf16 %v389
      %v454 = vunpack.c.l.bf16 %v390
      %v455 = vunpack.c.l.bf16 %v391
      %v456 = vunpack.c.l.bf16 %v392
      %v457 = vunpack.c.l.bf16 %v393
      %v458 = vunpack.c.l.bf16 %v394
      %v459 = vunpack.c.l.bf16 %v395
      %v460 = vunpack.c.l.bf16 %v396
      %v461 = vunpack.c.l.bf16 %v397
      %v462 = vld [vmem:[%s325] sm:$0xf]
      %v463 = vld [vmem:[%s325 + $0x4] sm:$0xf]
      %v464 = vld [vmem:[%s325 + $0x8] sm:$0xf]
      %v465 = vld [vmem:[%s325 + $0xc] sm:$0xf]
      %v466 = vld [vmem:[%s325 + $0x10] sm:$0xf]
      %v467 = vld [vmem:[%s325 + $0x14] sm:$0xf]
      %v468 = vld [vmem:[%s325 + $0x18] sm:$0xf]
      %v469 = vld [vmem:[%s325 + $0x1c] sm:$0xf]
      %v470 = vld [vmem:[%s325 + $0x20] sm:$0xf]
      %v471 = vld [vmem:[%s325 + $0x24] sm:$0xf]
      %v472 = vld [vmem:[%s325 + $0x28] sm:$0xf]
      %v473 = vld [vmem:[%s325 + $0x2c] sm:$0xf]
      %v474 = vld [vmem:[%s325 + $0x30] sm:$0xf]
      %v475 = vld [vmem:[%s325 + $0x34] sm:$0xf]
      %v476 = vld [vmem:[%s325 + $0x38] sm:$0xf]
      %v477 = vld [vmem:[%s325 + $0x3c] sm:$0xf]
      %v478 = vld [vmem:[%s325 + $0x40] sm:$0xf]
      %v479 = vld [vmem:[%s325 + $0x44] sm:$0xf]
      %v480 = vld [vmem:[%s325 + $0x48] sm:$0xf]
      %v481 = vld [vmem:[%s325 + $0x4c] sm:$0xf]
      %v482 = vld [vmem:[%s325 + $0x50] sm:$0xf]
      %v483 = vld [vmem:[%s325 + $0x54] sm:$0xf]
      %v484 = vld [vmem:[%s325 + $0x58] sm:$0xf]
      %v485 = vld [vmem:[%s325 + $0x5c] sm:$0xf]
      %v486 = vld [vmem:[%s325 + $0x60] sm:$0xf]
      %v487 = vld [vmem:[%s325 + $0x64] sm:$0xf]
      %v488 = vld [vmem:[%s325 + $0x68] sm:$0xf]
      %v489 = vld [vmem:[%s325 + $0x6c] sm:$0xf]
      %v490 = vld [vmem:[%s325 + $0x70] sm:$0xf]
      %v491 = vld [vmem:[%s325 + $0x74] sm:$0xf]
      %v492 = vld [vmem:[%s325 + $0x78] sm:$0xf]
      %v493 = vld [vmem:[%s325 + $0x7c] sm:$0xf]
      %v494 = vld [vmem:[%s325 + $0x80] sm:$0xf]
      %v495 = vld [vmem:[%s325 + $0x84] sm:$0xf]
      %v496 = vld [vmem:[%s325 + $0x88] sm:$0xf]
      %v497 = vld [vmem:[%s325 + $0x8c] sm:$0xf]
      %v498 = vld [vmem:[%s325 + $0x90] sm:$0xf]
      %v499 = vld [vmem:[%s325 + $0x94] sm:$0xf]
      %v500 = vld [vmem:[%s325 + $0x98] sm:$0xf]
      %v501 = vld [vmem:[%s325 + $0x9c] sm:$0xf]
      %v502 = vld [vmem:[%s325 + $0xa0] sm:$0xf]
      %v503 = vld [vmem:[%s325 + $0xa4] sm:$0xf]
      %v504 = vld [vmem:[%s325 + $0xa8] sm:$0xf]
      %v505 = vld [vmem:[%s325 + $0xac] sm:$0xf]
      %v506 = vld [vmem:[%s325 + $0xb0] sm:$0xf]
      %v507 = vld [vmem:[%s325 + $0xb4] sm:$0xf]
      %v508 = vld [vmem:[%s325 + $0xb8] sm:$0xf]
      %v509 = vld [vmem:[%s325 + $0xbc] sm:$0xf]
      %v510 = vld [vmem:[%s325 + $0xc0] sm:$0xf]
      %v511 = vld [vmem:[%s325 + $0xc4] sm:$0xf]
      %v512 = vld [vmem:[%s325 + $0xc8] sm:$0xf]
      %v513 = vld [vmem:[%s325 + $0xcc] sm:$0xf]
      %v514 = vld [vmem:[%s325 + $0xd0] sm:$0xf]
      %v515 = vld [vmem:[%s325 + $0xd4] sm:$0xf]
      %v516 = vld [vmem:[%s325 + $0xd8] sm:$0xf]
      %v517 = vld [vmem:[%s325 + $0xdc] sm:$0xf]
      %v518 = vld [vmem:[%s325 + $0xe0] sm:$0xf]
      %v519 = vld [vmem:[%s325 + $0xe4] sm:$0xf]
      %v520 = vld [vmem:[%s325 + $0xe8] sm:$0xf]
      %v521 = vld [vmem:[%s325 + $0xec] sm:$0xf]
      %v522 = vld [vmem:[%s325 + $0xf0] sm:$0xf]
      %v523 = vld [vmem:[%s325 + $0xf4] sm:$0xf]
      %v524 = vld [vmem:[%s325 + $0xf8] sm:$0xf]
      %v525 = vld [vmem:[%s325 + $0xfc] sm:$0xf]
      %v526 = vunpack.c.l.bf16 %v462
      %v527 = vunpack.c.l.bf16 %v463
      %v528 = vunpack.c.l.bf16 %v464
      %v529 = vunpack.c.l.bf16 %v465
      %v530 = vunpack.c.l.bf16 %v466
      %v531 = vunpack.c.l.bf16 %v467
      %v532 = vunpack.c.l.bf16 %v468
      %v533 = vunpack.c.l.bf16 %v469
      %v534 = vunpack.c.l.bf16 %v470
      %v535 = vunpack.c.l.bf16 %v471
      %v536 = vunpack.c.l.bf16 %v472
      %v537 = vunpack.c.l.bf16 %v473
      %v538 = vunpack.c.l.bf16 %v474
      %v539 = vunpack.c.l.bf16 %v475
      %v540 = vunpack.c.l.bf16 %v476
      %v541 = vunpack.c.l.bf16 %v477
      %v542 = vunpack.c.l.bf16 %v478
      %v543 = vunpack.c.l.bf16 %v479
      %v544 = vunpack.c.l.bf16 %v480
      %v545 = vunpack.c.l.bf16 %v481
      %v546 = vunpack.c.l.bf16 %v482
      %v547 = vunpack.c.l.bf16 %v483
      %v548 = vunpack.c.l.bf16 %v484
      %v549 = vunpack.c.l.bf16 %v485
      %v550 = vunpack.c.l.bf16 %v486
      %v551 = vunpack.c.l.bf16 %v487
      %v552 = vunpack.c.l.bf16 %v488
      %v553 = vunpack.c.l.bf16 %v489
      %v554 = vunpack.c.l.bf16 %v490
      %v555 = vunpack.c.l.bf16 %v491
      %v556 = vunpack.c.l.bf16 %v492
      %v557 = vunpack.c.l.bf16 %v493
      %v558 = vunpack.c.l.bf16 %v494
      %v559 = vunpack.c.l.bf16 %v495
      %v560 = vunpack.c.l.bf16 %v496
      %v561 = vunpack.c.l.bf16 %v497
      %v562 = vunpack.c.l.bf16 %v498
      %v563 = vunpack.c.l.bf16 %v499
      %v564 = vunpack.c.l.bf16 %v500
      %v565 = vunpack.c.l.bf16 %v501
      %v566 = vunpack.c.l.bf16 %v502
      %v567 = vunpack.c.l.bf16 %v503
      %v568 = vunpack.c.l.bf16 %v504
      %v569 = vunpack.c.l.bf16 %v505
      %v570 = vunpack.c.l.bf16 %v506
      %v571 = vunpack.c.l.bf16 %v507
      %v572 = vunpack.c.l.bf16 %v508
      %v573 = vunpack.c.l.bf16 %v509
      %v574 = vunpack.c.l.bf16 %v510
      %v575 = vunpack.c.l.bf16 %v511
      %v576 = vunpack.c.l.bf16 %v512
      %v577 = vunpack.c.l.bf16 %v513
      %v578 = vunpack.c.l.bf16 %v514
      %v579 = vunpack.c.l.bf16 %v515
      %v580 = vunpack.c.l.bf16 %v516
      %v581 = vunpack.c.l.bf16 %v517
      %v582 = vunpack.c.l.bf16 %v518
      %v583 = vunpack.c.l.bf16 %v519
      %v584 = vunpack.c.l.bf16 %v520
      %v585 = vunpack.c.l.bf16 %v521
      %v586 = vunpack.c.l.bf16 %v522
      %v587 = vunpack.c.l.bf16 %v523
      %v588 = vunpack.c.l.bf16 %v524
      %v589 = vunpack.c.l.bf16 %v525
      %v590 = vmul.f32 %v398, %v526
      %v591 = vmul.f32 %v399, %v527
      %v592 = vmul.f32 %v400, %v528
      %v593 = vmul.f32 %v401, %v529
      %v594 = vmul.f32 %v402, %v530
      %v595 = vmul.f32 %v403, %v531
      %v596 = vmul.f32 %v404, %v532
      %v597 = vmul.f32 %v405, %v533
      %v598 = vmul.f32 %v406, %v534
      %v599 = vmul.f32 %v407, %v535
      %v600 = vmul.f32 %v408, %v536
      %v601 = vmul.f32 %v409, %v537
      %v602 = vmul.f32 %v410, %v538
      %v603 = vmul.f32 %v411, %v539
      %v604 = vmul.f32 %v412, %v540
      %v605 = vmul.f32 %v413, %v541
      %v606 = vmul.f32 %v414, %v542
      %v607 = vmul.f32 %v415, %v543
      %v608 = vmul.f32 %v416, %v544
      %v609 = vmul.f32 %v417, %v545
      %v610 = vmul.f32 %v418, %v546
      %v611 = vmul.f32 %v419, %v547
      %v612 = vmul.f32 %v420, %v548
      %v613 = vmul.f32 %v421, %v549
      %v614 = vmul.f32 %v422, %v550
      %v615 = vmul.f32 %v423, %v551
      %v616 = vmul.f32 %v424, %v552
      %v617 = vmul.f32 %v425, %v553
      %v618 = vmul.f32 %v426, %v554
      %v619 = vmul.f32 %v427, %v555
      %v620 = vmul.f32 %v428, %v556
      %v621 = vmul.f32 %v429, %v557
      %v622 = vmul.f32 %v430, %v558
      %v623 = vmul.f32 %v431, %v559
      %v624 = vmul.f32 %v432, %v560
      %v625 = vmul.f32 %v433, %v561
      %v626 = vmul.f32 %v434, %v562
      %v627 = vmul.f32 %v435, %v563
      %v628 = vmul.f32 %v436, %v564
      %v629 = vmul.f32 %v437, %v565
      %v630 = vmul.f32 %v438, %v566
      %v631 = vmul.f32 %v439, %v567
      %v632 = vmul.f32 %v440, %v568
      %v633 = vmul.f32 %v441, %v569
      %v634 = vmul.f32 %v442, %v570
      %v635 = vmul.f32 %v443, %v571
      %v636 = vmul.f32 %v444, %v572
      %v637 = vmul.f32 %v445, %v573
      %v638 = vmul.f32 %v446, %v574
      %v639 = vmul.f32 %v447, %v575
      %v640 = vmul.f32 %v448, %v576
      %v641 = vmul.f32 %v449, %v577
      %v642 = vmul.f32 %v450, %v578
      %v643 = vmul.f32 %v451, %v579
      %v644 = vmul.f32 %v452, %v580
      %v645 = vmul.f32 %v453, %v581
      %v646 = vmul.f32 %v454, %v582
      %v647 = vmul.f32 %v455, %v583
      %v648 = vmul.f32 %v456, %v584
      %v649 = vmul.f32 %v457, %v585
      %v650 = vmul.f32 %v458, %v586
      %v651 = vmul.f32 %v459, %v587
      %v652 = vmul.f32 %v460, %v588
      %v653 = vmul.f32 %v461, %v589
      %v654 = vpack.c.bf16 %v591, %v590
      %v655 = vpack.c.bf16 %v593, %v592
      %v656 = vpack.c.bf16 %v595, %v594
      %v657 = vpack.c.bf16 %v597, %v596
      %v658 = vpack.c.bf16 %v599, %v598
      %v659 = vpack.c.bf16 %v601, %v600
      %v660 = vpack.c.bf16 %v603, %v602
      %v661 = vpack.c.bf16 %v605, %v604
      %v662 = vpack.c.bf16 %v607, %v606
      %v663 = vpack.c.bf16 %v609, %v608
      %v664 = vpack.c.bf16 %v611, %v610
      %v665 = vpack.c.bf16 %v613, %v612
      %v666 = vpack.c.bf16 %v615, %v614
      %v667 = vpack.c.bf16 %v617, %v616
      %v668 = vpack.c.bf16 %v619, %v618
      %v669 = vpack.c.bf16 %v621, %v620
      %v670 = vpack.c.bf16 %v623, %v622
      %v671 = vpack.c.bf16 %v625, %v624
      %v672 = vpack.c.bf16 %v627, %v626
      %v673 = vpack.c.bf16 %v629, %v628
      %v674 = vpack.c.bf16 %v631, %v630
      %v675 = vpack.c.bf16 %v633, %v632
      %v676 = vpack.c.bf16 %v635, %v634
      %v677 = vpack.c.bf16 %v637, %v636
      %v678 = vpack.c.bf16 %v639, %v638
      %v679 = vpack.c.bf16 %v641, %v640
      %v680 = vpack.c.bf16 %v643, %v642
      %v681 = vpack.c.bf16 %v645, %v644
      %v682 = vpack.c.bf16 %v647, %v646
      %v683 = vpack.c.bf16 %v649, %v648
      %v684 = vpack.c.bf16 %v651, %v650
      %v685 = vpack.c.bf16 %v653, %v652
      %v686 = vld [vmem:[%s2] sm:$0xf]
      %v687 = vld [vmem:[%s2 + $0x4] sm:$0xf]
      %v688 = vld [vmem:[%s2 + $0x8] sm:$0xf]
      %v689 = vld [vmem:[%s2 + $0xc] sm:$0xf]
      %v690 = vld [vmem:[%s3] sm:$0x1]
      %v692 = vlaneseq
      %v693 = vshrl.u32 %v692, 7
      %v694 = vsub.s32 0, %v693
      %v695 = vrot.slane %v690, %v694
      %v701 = vunpack.c.l.b16 %v686
      %v702 = vunpack.c.l.b16 %v687
      %v703 = vunpack.c.l.b16 %v688
      %v704 = vunpack.c.l.b16 %v689
      %v705 = vpack.c.b16 %v702, %v701
      %v706 = vpack.c.b16 %v704, %v703
      %vm709 = vcmask 261120
      %v711 = vsel %vm709, %v654, 0
      %v714 = vsel %vm709, %v655, 0
      %v717 = vsel %vm709, %v656, 0
      %v720 = vsel %vm709, %v657, 0
      %v723 = vsel %vm709, %v658, 0
      %v726 = vsel %vm709, %v659, 0
      %v729 = vsel %vm709, %v660, 0
      %v732 = vsel %vm709, %v661, 0
      %v735 = vsel %vm709, %v662, 0
      %v738 = vsel %vm709, %v663, 0
      %v741 = vsel %vm709, %v664, 0
      %v744 = vsel %vm709, %v665, 0
      %v747 = vsel %vm709, %v666, 0
      %v750 = vsel %vm709, %v667, 0
      %v753 = vsel %vm709, %v668, 0
      %v756 = vsel %vm709, %v669, 0
      %v759 = vsel %vm709, %v670, 0
      %v762 = vsel %vm709, %v671, 0
      %v765 = vsel %vm709, %v672, 0
      %v768 = vsel %vm709, %v673, 0
      %v771 = vsel %vm709, %v674, 0
      %v774 = vsel %vm709, %v675, 0
      %v777 = vsel %vm709, %v676, 0
      %v780 = vsel %vm709, %v677, 0
      %v783 = vsel %vm709, %v678, 0
      %v786 = vsel %vm709, %v679, 0
      %v789 = vsel %vm709, %v680, 0
      %v792 = vsel %vm709, %v681, 0
      %v795 = vsel %vm709, %v682, 0
      %v798 = vsel %vm709, %v683, 0
      %v801 = vsel %vm709, %v684, 0
      %v804 = vsel %vm709, %v685, 0
      %806 = vmatprep.subr.bf16.mxu0 0
      %807 = vmatpush1.bf16.msra.mxu0 0
      %808 = vmatprep.subr.bf16.mxu0 0
      %809 = vmatpush1.bf16.msra.mxu0 0
      %810 = vmatprep.subr.bf16.mxu0 0
      %811 = vmatpush1.bf16.msra.mxu0 0
      %812 = vmatprep.subr.bf16.mxu0 0
      %813 = vmatpush1.bf16.msra.mxu0 0
      %814 = vmatprep.subr.bf16.mxu0 0
      %815 = vmatpush1.bf16.msra.mxu0 0
      %816 = vmatprep.subr.bf16.mxu0 0
      %817 = vmatpush1.bf16.msra.mxu0 0
      %818 = vmatprep.subr.bf16.mxu0 0
      %819 = vmatpush1.bf16.msra.mxu0 %v706
      %820 = vmatprep.subr.bf16.mxu0 0
      %821 = vmatpush1.bf16.msra.mxu0 %v705
      %822 = vmatprep.subr.bf16.mxu0 0
      %823 = vmatpush2.bf16.msra.mxu0 0
      %824 = vmatprep.subr.bf16.mxu0 0
      %825 = vmatpush2.bf16.msra.mxu0 0
      %826 = vmatprep.subr.bf16.mxu0 0
      %827 = vmatpush2.bf16.msra.mxu0 0
      %828 = vmatprep.subr.bf16.mxu0 0
      %829 = vmatpush2.bf16.msra.mxu0 0
      %830 = vmatprep.subr.bf16.mxu0 0
      %831 = vmatpush2.bf16.msra.mxu0 0
      %832 = vmatprep.subr.bf16.mxu0 0
      %833 = vmatpush2.bf16.msra.mxu0 0
      %834 = vmatprep.subr.bf16.mxu0 0
      %835 = vmatpush2.bf16.msra.mxu0 0
      %836 = vmatprep.subr.bf16.mxu0 0
      %837 = vmatpush2.bf16.msra.mxu0 0
      %838 = vmatprep.mubr.bf16.mxu0 0
      %839 = vmatmul.mubr.bf16.gmra.mxu0 %v711
      %v840 = vpop.f32.mrf.mxu0
      %v841 = vadd.f32 %v695, %v840
      %v842 = vpop.f32.mrf.mxu0
      %v843 = vpop.f32.mrf.mxu0
      %v844 = vadd.f32 %v695, %v843
      %v845 = vpop.f32.mrf.mxu0
      %846 = vmatprep.mubr.bf16.mxu0 0
      %847 = vmatmul.mubr.bf16.gmra.mxu0 %v714
      %v848 = vpop.f32.mrf.mxu0
      %v849 = vadd.f32 %v695, %v848
      %v850 = vpop.f32.mrf.mxu0
      %v851 = vpop.f32.mrf.mxu0
      %v852 = vadd.f32 %v695, %v851
      %v853 = vpop.f32.mrf.mxu0
      %854 = vmatprep.mubr.bf16.mxu0 0
      %855 = vmatmul.mubr.bf16.gmra.mxu0 %v717
      %v856 = vpop.f32.mrf.mxu0
      %v857 = vadd.f32 %v695, %v856
      %v858 = vpop.f32.mrf.mxu0
      %v859 = vpop.f32.mrf.mxu0
      %v860 = vadd.f32 %v695, %v859
      %v861 = vpop.f32.mrf.mxu0
      %862 = vmatprep.mubr.bf16.mxu0 0
      %863 = vmatmul.mubr.bf16.gmra.mxu0 %v720
      %v864 = vpop.f32.mrf.mxu0
      %v865 = vadd.f32 %v695, %v864
      %v866 = vpop.f32.mrf.mxu0
      %v867 = vpop.f32.mrf.mxu0
      %v868 = vadd.f32 %v695, %v867
      %v869 = vpop.f32.mrf.mxu0
      %870 = vmatprep.mubr.bf16.mxu0 0
      %871 = vmatmul.mubr.bf16.gmra.mxu0 %v723
      %v872 = vpop.f32.mrf.mxu0
      %v873 = vadd.f32 %v695, %v872
      %v874 = vpop.f32.mrf.mxu0
      %v875 = vpop.f32.mrf.mxu0
      %v876 = vadd.f32 %v695, %v875
      %v877 = vpop.f32.mrf.mxu0
      %878 = vmatprep.mubr.bf16.mxu0 0
      %879 = vmatmul.mubr.bf16.gmra.mxu0 %v726
      %v880 = vpop.f32.mrf.mxu0
      %v881 = vadd.f32 %v695, %v880
      %v882 = vpop.f32.mrf.mxu0
      %v883 = vpop.f32.mrf.mxu0
      %v884 = vadd.f32 %v695, %v883
      %v885 = vpop.f32.mrf.mxu0
      %886 = vmatprep.mubr.bf16.mxu0 0
      %887 = vmatmul.mubr.bf16.gmra.mxu0 %v729
      %v888 = vpop.f32.mrf.mxu0
      %v889 = vadd.f32 %v695, %v888
      %v890 = vpop.f32.mrf.mxu0
      %v891 = vpop.f32.mrf.mxu0
      %v892 = vadd.f32 %v695, %v891
      %v893 = vpop.f32.mrf.mxu0
      %894 = vmatprep.mubr.bf16.mxu0 0
      %895 = vmatmul.mubr.bf16.gmra.mxu0 %v732
      %v896 = vpop.f32.mrf.mxu0
      %v897 = vadd.f32 %v695, %v896
      %v898 = vpop.f32.mrf.mxu0
      %v899 = vpop.f32.mrf.mxu0
      %v900 = vadd.f32 %v695, %v899
      %v901 = vpop.f32.mrf.mxu0
      %902 = vmatprep.mubr.bf16.mxu0 0
      %903 = vmatmul.mubr.bf16.gmra.mxu0 %v735
      %v904 = vpop.f32.mrf.mxu0
      %v905 = vadd.f32 %v695, %v904
      %v906 = vpop.f32.mrf.mxu0
      %v907 = vpop.f32.mrf.mxu0
      %v908 = vadd.f32 %v695, %v907
      %v909 = vpop.f32.mrf.mxu0
      %910 = vmatprep.mubr.bf16.mxu0 0
      %911 = vmatmul.mubr.bf16.gmra.mxu0 %v738
      %v912 = vpop.f32.mrf.mxu0
      %v913 = vadd.f32 %v695, %v912
      %v914 = vpop.f32.mrf.mxu0
      %v915 = vpop.f32.mrf.mxu0
      %v916 = vadd.f32 %v695, %v915
      %v917 = vpop.f32.mrf.mxu0
      %918 = vmatprep.mubr.bf16.mxu0 0
      %919 = vmatmul.mubr.bf16.gmra.mxu0 %v741
      %v920 = vpop.f32.mrf.mxu0
      %v921 = vadd.f32 %v695, %v920
      %v922 = vpop.f32.mrf.mxu0
      %v923 = vpop.f32.mrf.mxu0
      %v924 = vadd.f32 %v695, %v923
      %v925 = vpop.f32.mrf.mxu0
      %926 = vmatprep.mubr.bf16.mxu0 0
      %927 = vmatmul.mubr.bf16.gmra.mxu0 %v744
      %v928 = vpop.f32.mrf.mxu0
      %v929 = vadd.f32 %v695, %v928
      %v930 = vpop.f32.mrf.mxu0
      %v931 = vpop.f32.mrf.mxu0
      %v932 = vadd.f32 %v695, %v931
      %v933 = vpop.f32.mrf.mxu0
      %934 = vmatprep.mubr.bf16.mxu0 0
      %935 = vmatmul.mubr.bf16.gmra.mxu0 %v747
      %v936 = vpop.f32.mrf.mxu0
      %v937 = vadd.f32 %v695, %v936
      %v938 = vpop.f32.mrf.mxu0
      %v939 = vpop.f32.mrf.mxu0
      %v940 = vadd.f32 %v695, %v939
      %v941 = vpop.f32.mrf.mxu0
      %942 = vmatprep.mubr.bf16.mxu0 0
      %943 = vmatmul.mubr.bf16.gmra.mxu0 %v750
      %v944 = vpop.f32.mrf.mxu0
      %v945 = vadd.f32 %v695, %v944
      %v946 = vpop.f32.mrf.mxu0
      %v947 = vpop.f32.mrf.mxu0
      %v948 = vadd.f32 %v695, %v947
      %v949 = vpop.f32.mrf.mxu0
      %950 = vmatprep.mubr.bf16.mxu0 0
      %951 = vmatmul.mubr.bf16.gmra.mxu0 %v753
      %v952 = vpop.f32.mrf.mxu0
      %v953 = vadd.f32 %v695, %v952
      %v954 = vpop.f32.mrf.mxu0
      %v955 = vpop.f32.mrf.mxu0
      %v956 = vadd.f32 %v695, %v955
      %v957 = vpop.f32.mrf.mxu0
      %958 = vmatprep.mubr.bf16.mxu0 0
      %959 = vmatmul.mubr.bf16.gmra.mxu0 %v756
      %v960 = vpop.f32.mrf.mxu0
      %v961 = vadd.f32 %v695, %v960
      %v962 = vpop.f32.mrf.mxu0
      %v963 = vpop.f32.mrf.mxu0
      %v964 = vadd.f32 %v695, %v963
      %v965 = vpop.f32.mrf.mxu0
      %966 = vmatprep.mubr.bf16.mxu0 0
      %967 = vmatmul.mubr.bf16.gmra.mxu0 %v759
      %v968 = vpop.f32.mrf.mxu0
      %v969 = vadd.f32 %v695, %v968
      %v970 = vpop.f32.mrf.mxu0
      %v971 = vpop.f32.mrf.mxu0
      %v972 = vadd.f32 %v695, %v971
      %v973 = vpop.f32.mrf.mxu0
      %974 = vmatprep.mubr.bf16.mxu0 0
      %975 = vmatmul.mubr.bf16.gmra.mxu0 %v762
      %v976 = vpop.f32.mrf.mxu0
      %v977 = vadd.f32 %v695, %v976
      %v978 = vpop.f32.mrf.mxu0
      %v979 = vpop.f32.mrf.mxu0
      %v980 = vadd.f32 %v695, %v979
      %v981 = vpop.f32.mrf.mxu0
      %982 = vmatprep.mubr.bf16.mxu0 0
      %983 = vmatmul.mubr.bf16.gmra.mxu0 %v765
      %v984 = vpop.f32.mrf.mxu0
      %v985 = vadd.f32 %v695, %v984
      %v986 = vpop.f32.mrf.mxu0
      %v987 = vpop.f32.mrf.mxu0
      %v988 = vadd.f32 %v695, %v987
      %v989 = vpop.f32.mrf.mxu0
      %990 = vmatprep.mubr.bf16.mxu0 0
      %991 = vmatmul.mubr.bf16.gmra.mxu0 %v768
      %v992 = vpop.f32.mrf.mxu0
      %v993 = vadd.f32 %v695, %v992
      %v994 = vpop.f32.mrf.mxu0
      %v995 = vpop.f32.mrf.mxu0
      %v996 = vadd.f32 %v695, %v995
      %v997 = vpop.f32.mrf.mxu0
      %998 = vmatprep.mubr.bf16.mxu0 0
      %999 = vmatmul.mubr.bf16.gmra.mxu0 %v771
      %v1000 = vpop.f32.mrf.mxu0
      %v1001 = vadd.f32 %v695, %v1000
      %v1002 = vpop.f32.mrf.mxu0
      %v1003 = vpop.f32.mrf.mxu0
      %v1004 = vadd.f32 %v695, %v1003
      %v1005 = vpop.f32.mrf.mxu0
      %1006 = vmatprep.mubr.bf16.mxu0 0
      %1007 = vmatmul.mubr.bf16.gmra.mxu0 %v774
      %v1008 = vpop.f32.mrf.mxu0
      %v1009 = vadd.f32 %v695, %v1008
      %v1010 = vpop.f32.mrf.mxu0
      %v1011 = vpop.f32.mrf.mxu0
      %v1012 = vadd.f32 %v695, %v1011
      %v1013 = vpop.f32.mrf.mxu0
      %1014 = vmatprep.mubr.bf16.mxu0 0
      %1015 = vmatmul.mubr.bf16.gmra.mxu0 %v777
      %v1016 = vpop.f32.mrf.mxu0
      %v1017 = vadd.f32 %v695, %v1016
      %v1018 = vpop.f32.mrf.mxu0
      %v1019 = vpop.f32.mrf.mxu0
      %v1020 = vadd.f32 %v695, %v1019
      %v1021 = vpop.f32.mrf.mxu0
      %1022 = vmatprep.mubr.bf16.mxu0 0
      %1023 = vmatmul.mubr.bf16.gmra.mxu0 %v780
      %v1024 = vpop.f32.mrf.mxu0
      %v1025 = vadd.f32 %v695, %v1024
      %v1026 = vpop.f32.mrf.mxu0
      %v1027 = vpop.f32.mrf.mxu0
      %v1028 = vadd.f32 %v695, %v1027
      %v1029 = vpop.f32.mrf.mxu0
      %1030 = vmatprep.mubr.bf16.mxu0 0
      %1031 = vmatmul.mubr.bf16.gmra.mxu0 %v783
      %v1032 = vpop.f32.mrf.mxu0
      %v1033 = vadd.f32 %v695, %v1032
      %v1034 = vpop.f32.mrf.mxu0
      %v1035 = vpop.f32.mrf.mxu0
      %v1036 = vadd.f32 %v695, %v1035
      %v1037 = vpop.f32.mrf.mxu0
      %1038 = vmatprep.mubr.bf16.mxu0 0
      %1039 = vmatmul.mubr.bf16.gmra.mxu0 %v786
      %v1040 = vpop.f32.mrf.mxu0
      %v1041 = vadd.f32 %v695, %v1040
      %v1042 = vpop.f32.mrf.mxu0
      %v1043 = vpop.f32.mrf.mxu0
      %v1044 = vadd.f32 %v695, %v1043
      %v1045 = vpop.f32.mrf.mxu0
      %1046 = vmatprep.mubr.bf16.mxu0 0
      %1047 = vmatmul.mubr.bf16.gmra.mxu0 %v789
      %v1048 = vpop.f32.mrf.mxu0
      %v1049 = vadd.f32 %v695, %v1048
      %v1050 = vpop.f32.mrf.mxu0
      %v1051 = vpop.f32.mrf.mxu0
      %v1052 = vadd.f32 %v695, %v1051
      %v1053 = vpop.f32.mrf.mxu0
      %1054 = vmatprep.mubr.bf16.mxu0 0
      %1055 = vmatmul.mubr.bf16.gmra.mxu0 %v792
      %v1056 = vpop.f32.mrf.mxu0
      %v1057 = vadd.f32 %v695, %v1056
      %v1058 = vpop.f32.mrf.mxu0
      %v1059 = vpop.f32.mrf.mxu0
      %v1060 = vadd.f32 %v695, %v1059
      %v1061 = vpop.f32.mrf.mxu0
      %1062 = vmatprep.mubr.bf16.mxu0 0
      %1063 = vmatmul.mubr.bf16.gmra.mxu0 %v795
      %v1064 = vpop.f32.mrf.mxu0
      %v1065 = vadd.f32 %v695, %v1064
      %v1066 = vpop.f32.mrf.mxu0
      %v1067 = vpop.f32.mrf.mxu0
      %v1068 = vadd.f32 %v695, %v1067
      %v1069 = vpop.f32.mrf.mxu0
      %1070 = vmatprep.mubr.bf16.mxu0 0
      %1071 = vmatmul.mubr.bf16.gmra.mxu0 %v798
      %v1072 = vpop.f32.mrf.mxu0
      %v1073 = vadd.f32 %v695, %v1072
      %v1074 = vpop.f32.mrf.mxu0
      %v1075 = vpop.f32.mrf.mxu0
      %v1076 = vadd.f32 %v695, %v1075
      %v1077 = vpop.f32.mrf.mxu0
      %1078 = vmatprep.mubr.bf16.mxu0 0
      %1079 = vmatmul.mubr.bf16.gmra.mxu0 %v801
      %v1080 = vpop.f32.mrf.mxu0
      %v1081 = vadd.f32 %v695, %v1080
      %v1082 = vpop.f32.mrf.mxu0
      %v1083 = vpop.f32.mrf.mxu0
      %v1084 = vadd.f32 %v695, %v1083
      %v1085 = vpop.f32.mrf.mxu0
      %1086 = vmatprep.mubr.bf16.mxu0 0
      %1087 = vmatmul.mubr.bf16.gmra.mxu0 %v804
      %v1088 = vpop.f32.mrf.mxu0
      %v1089 = vadd.f32 %v695, %v1088
      %v1090 = vpop.f32.mrf.mxu0
      %v1091 = vpop.f32.mrf.mxu0
      %v1092 = vadd.f32 %v695, %v1091
      %v1093 = vpop.f32.mrf.mxu0
      %1094 = vdwg.mxu0
      %v1095 = vmax.f32 %v841, 0.0
      %v1096 = vmax.f32 %v844, 0.0
      %v1097 = vmax.f32 %v849, 0.0
      %v1098 = vmax.f32 %v852, 0.0
      %v1099 = vmax.f32 %v857, 0.0
      %v1100 = vmax.f32 %v860, 0.0
      %v1101 = vmax.f32 %v865, 0.0
      %v1102 = vmax.f32 %v868, 0.0
      %v1103 = vmax.f32 %v873, 0.0
      %v1104 = vmax.f32 %v876, 0.0
      %v1105 = vmax.f32 %v881, 0.0
      %v1106 = vmax.f32 %v884, 0.0
      %v1107 = vmax.f32 %v889, 0.0
      %v1108 = vmax.f32 %v892, 0.0
      %v1109 = vmax.f32 %v897, 0.0
      %v1110 = vmax.f32 %v900, 0.0
      %v1111 = vmax.f32 %v905, 0.0
      %v1112 = vmax.f32 %v908, 0.0
      %v1113 = vmax.f32 %v913, 0.0
      %v1114 = vmax.f32 %v916, 0.0
      %v1115 = vmax.f32 %v921, 0.0
      %v1116 = vmax.f32 %v924, 0.0
      %v1117 = vmax.f32 %v929, 0.0
      %v1118 = vmax.f32 %v932, 0.0
      %v1119 = vmax.f32 %v937, 0.0
      %v1120 = vmax.f32 %v940, 0.0
      %v1121 = vmax.f32 %v945, 0.0
      %v1122 = vmax.f32 %v948, 0.0
      %v1123 = vmax.f32 %v953, 0.0
      %v1124 = vmax.f32 %v956, 0.0
      %v1125 = vmax.f32 %v961, 0.0
      %v1126 = vmax.f32 %v964, 0.0
      %v1127 = vmax.f32 %v969, 0.0
      %v1128 = vmax.f32 %v972, 0.0
      %v1129 = vmax.f32 %v977, 0.0
      %v1130 = vmax.f32 %v980, 0.0
      %v1131 = vmax.f32 %v985, 0.0
      %v1132 = vmax.f32 %v988, 0.0
      %v1133 = vmax.f32 %v993, 0.0
      %v1134 = vmax.f32 %v996, 0.0
      %v1135 = vmax.f32 %v1001, 0.0
      %v1136 = vmax.f32 %v1004, 0.0
      %v1137 = vmax.f32 %v1009, 0.0
      %v1138 = vmax.f32 %v1012, 0.0
      %v1139 = vmax.f32 %v1017, 0.0
      %v1140 = vmax.f32 %v1020, 0.0
      %v1141 = vmax.f32 %v1025, 0.0
      %v1142 = vmax.f32 %v1028, 0.0
      %v1143 = vmax.f32 %v1033, 0.0
      %v1144 = vmax.f32 %v1036, 0.0
      %v1145 = vmax.f32 %v1041, 0.0
      %v1146 = vmax.f32 %v1044, 0.0
      %v1147 = vmax.f32 %v1049, 0.0
      %v1148 = vmax.f32 %v1052, 0.0
      %v1149 = vmax.f32 %v1057, 0.0
      %v1150 = vmax.f32 %v1060, 0.0
      %v1151 = vmax.f32 %v1065, 0.0
      %v1152 = vmax.f32 %v1068, 0.0
      %v1153 = vmax.f32 %v1073, 0.0
      %v1154 = vmax.f32 %v1076, 0.0
      %v1155 = vmax.f32 %v1081, 0.0
      %v1156 = vmax.f32 %v1084, 0.0
      %v1157 = vmax.f32 %v1089, 0.0
      %v1158 = vmax.f32 %v1092, 0.0
      %v1159 = vpack.c.bf16 %v1096, %v1095
      %v1160 = vpack.c.bf16 %v1098, %v1097
      %v1161 = vpack.c.bf16 %v1100, %v1099
      %v1162 = vpack.c.bf16 %v1102, %v1101
      %v1163 = vpack.c.bf16 %v1104, %v1103
      %v1164 = vpack.c.bf16 %v1106, %v1105
      %v1165 = vpack.c.bf16 %v1108, %v1107
      %v1166 = vpack.c.bf16 %v1110, %v1109
      %v1167 = vpack.c.bf16 %v1112, %v1111
      %v1168 = vpack.c.bf16 %v1114, %v1113
      %v1169 = vpack.c.bf16 %v1116, %v1115
      %v1170 = vpack.c.bf16 %v1118, %v1117
      %v1171 = vpack.c.bf16 %v1120, %v1119
      %v1172 = vpack.c.bf16 %v1122, %v1121
      %v1173 = vpack.c.bf16 %v1124, %v1123
      %v1174 = vpack.c.bf16 %v1126, %v1125
      %v1175 = vpack.c.bf16 %v1128, %v1127
      %v1176 = vpack.c.bf16 %v1130, %v1129
      %v1177 = vpack.c.bf16 %v1132, %v1131
      %v1178 = vpack.c.bf16 %v1134, %v1133
      %v1179 = vpack.c.bf16 %v1136, %v1135
      %v1180 = vpack.c.bf16 %v1138, %v1137
      %v1181 = vpack.c.bf16 %v1140, %v1139
      %v1182 = vpack.c.bf16 %v1142, %v1141
      %v1183 = vpack.c.bf16 %v1144, %v1143
      %v1184 = vpack.c.bf16 %v1146, %v1145
      %v1185 = vpack.c.bf16 %v1148, %v1147
      %v1186 = vpack.c.bf16 %v1150, %v1149
      %v1187 = vpack.c.bf16 %v1152, %v1151
      %v1188 = vpack.c.bf16 %v1154, %v1153
      %v1189 = vpack.c.bf16 %v1156, %v1155
      %v1190 = vpack.c.bf16 %v1158, %v1157
      %v1191 = vld [vmem:[%s4] sm:$0xf]
      %v1192 = vld [vmem:[%s4 + $0x4] sm:$0xf]
      %v1193 = vld [vmem:[%s4 + $0x8] sm:$0xf]
      %v1194 = vld [vmem:[%s4 + $0xc] sm:$0xf]
      %v1195 = vld [vmem:[%s4 + $0x10] sm:$0xf]
      %v1196 = vld [vmem:[%s4 + $0x14] sm:$0xf]
      %v1197 = vld [vmem:[%s4 + $0x18] sm:$0xf]
      %v1198 = vld [vmem:[%s4 + $0x1c] sm:$0xf]
      %v1199 = vld [vmem:[%s4 + $0x20] sm:$0xf]
      %v1200 = vld [vmem:[%s4 + $0x24] sm:$0xf]
      %v1201 = vld [vmem:[%s4 + $0x28] sm:$0xf]
      %v1202 = vld [vmem:[%s4 + $0x2c] sm:$0xf]
      %v1203 = vld [vmem:[%s4 + $0x30] sm:$0xf]
      %v1204 = vld [vmem:[%s4 + $0x34] sm:$0xf]
      %v1205 = vld [vmem:[%s4 + $0x38] sm:$0xf]
      %v1206 = vld [vmem:[%s4 + $0x3c] sm:$0xf]
      %v1207 = vld [vmem:[%s5] sm:$0x1]
      %v1209 = vlaneseq
      %v1210 = vshrl.u32 %v1209, 7
      %v1211 = vsub.s32 0, %v1210
      %v1212 = vrot.slane %v1207, %v1211
      %v1230 = vunpack.c.l.b16 %v1191
      %v1231 = vunpack.c.l.b16 %v1192
      %v1232 = vunpack.c.l.b16 %v1193
      %v1233 = vunpack.c.l.b16 %v1194
      %v1234 = vunpack.c.l.b16 %v1195
      %v1235 = vunpack.c.l.b16 %v1196
      %v1236 = vunpack.c.l.b16 %v1197
      %v1237 = vunpack.c.l.b16 %v1198
      %v1238 = vunpack.c.l.b16 %v1199
      %v1239 = vunpack.c.l.b16 %v1200
      %v1240 = vunpack.c.l.b16 %v1201
      %v1241 = vunpack.c.l.b16 %v1202
      %v1242 = vunpack.c.l.b16 %v1203
      %v1243 = vunpack.c.l.b16 %v1204
      %v1244 = vunpack.c.l.b16 %v1205
      %v1245 = vunpack.c.l.b16 %v1206
      %v1246 = vpack.c.b16 %v1231, %v1230
      %v1247 = vpack.c.b16 %v1233, %v1232
      %v1248 = vpack.c.b16 %v1235, %v1234
      %v1249 = vpack.c.b16 %v1237, %v1236
      %v1250 = vpack.c.b16 %v1239, %v1238
      %v1251 = vpack.c.b16 %v1241, %v1240
      %v1252 = vpack.c.b16 %v1243, %v1242
      %v1253 = vpack.c.b16 %v1245, %v1244
      %1262 = vmatprep.subr.bf16.mxu0 0
      %1263 = vmatpush1.bf16.msra.mxu0 %v1253
      %1264 = vmatprep.subr.bf16.mxu0 0
      %1265 = vmatpush1.bf16.msra.mxu0 %v1252
      %1266 = vmatprep.subr.bf16.mxu0 0
      %1267 = vmatpush1.bf16.msra.mxu0 %v1251
      %1268 = vmatprep.subr.bf16.mxu0 0
      %1269 = vmatpush1.bf16.msra.mxu0 %v1250
      %1270 = vmatprep.subr.bf16.mxu0 0
      %1271 = vmatpush1.bf16.msra.mxu0 %v1249
      %1272 = vmatprep.subr.bf16.mxu0 0
      %1273 = vmatpush1.bf16.msra.mxu0 %v1248
      %1274 = vmatprep.subr.bf16.mxu0 0
      %1275 = vmatpush1.bf16.msra.mxu0 %v1247
      %1276 = vmatprep.subr.bf16.mxu0 0
      %1277 = vmatpush1.bf16.msra.mxu0 %v1246
      %1278 = vmatprep.subr.bf16.mxu0 0
      %1279 = vmatpush2.bf16.msra.mxu0 0
      %1280 = vmatprep.subr.bf16.mxu0 0
      %1281 = vmatpush2.bf16.msra.mxu0 0
      %1282 = vmatprep.subr.bf16.mxu0 0
      %1283 = vmatpush2.bf16.msra.mxu0 0
      %1284 = vmatprep.subr.bf16.mxu0 0
      %1285 = vmatpush2.bf16.msra.mxu0 0
      %1286 = vmatprep.subr.bf16.mxu0 0
      %1287 = vmatpush2.bf16.msra.mxu0 0
      %1288 = vmatprep.subr.bf16.mxu0 0
      %1289 = vmatpush2.bf16.msra.mxu0 0
      %1290 = vmatprep.subr.bf16.mxu0 0
      %1291 = vmatpush2.bf16.msra.mxu0 0
      %1292 = vmatprep.subr.bf16.mxu0 0
      %1293 = vmatpush2.bf16.msra.mxu0 0
      %1294 = vmatprep.mubr.bf16.mxu0 0
      %1295 = vmatmul.mubr.bf16.gmra.mxu0 %v1159
      %v1296 = vpop.f32.mrf.mxu0
      %v1297 = vadd.f32 %v1212, %v1296
      %v1298 = vpop.f32.mrf.mxu0
      %v1299 = vpop.f32.mrf.mxu0
      %v1300 = vadd.f32 %v1212, %v1299
      %v1301 = vpop.f32.mrf.mxu0
      %1302 = vmatprep.mubr.bf16.mxu0 0
      %1303 = vmatmul.mubr.bf16.gmra.mxu0 %v1160
      %v1304 = vpop.f32.mrf.mxu0
      %v1305 = vadd.f32 %v1212, %v1304
      %v1306 = vpop.f32.mrf.mxu0
      %v1307 = vpop.f32.mrf.mxu0
      %v1308 = vadd.f32 %v1212, %v1307
      %v1309 = vpop.f32.mrf.mxu0
      %1310 = vmatprep.mubr.bf16.mxu0 0
      %1311 = vmatmul.mubr.bf16.gmra.mxu0 %v1161
      %v1312 = vpop.f32.mrf.mxu0
      %v1313 = vadd.f32 %v1212, %v1312
      %v1314 = vpop.f32.mrf.mxu0
      %v1315 = vpop.f32.mrf.mxu0
      %v1316 = vadd.f32 %v1212, %v1315
      %v1317 = vpop.f32.mrf.mxu0
      %1318 = vmatprep.mubr.bf16.mxu0 0
      %1319 = vmatmul.mubr.bf16.gmra.mxu0 %v1162
      %v1320 = vpop.f32.mrf.mxu0
      %v1321 = vadd.f32 %v1212, %v1320
      %v1322 = vpop.f32.mrf.mxu0
      %v1323 = vpop.f32.mrf.mxu0
      %v1324 = vadd.f32 %v1212, %v1323
      %v1325 = vpop.f32.mrf.mxu0
      %1326 = vmatprep.mubr.bf16.mxu0 0
      %1327 = vmatmul.mubr.bf16.gmra.mxu0 %v1163
      %v1328 = vpop.f32.mrf.mxu0
      %v1329 = vadd.f32 %v1212, %v1328
      %v1330 = vpop.f32.mrf.mxu0
      %v1331 = vpop.f32.mrf.mxu0
      %v1332 = vadd.f32 %v1212, %v1331
      %v1333 = vpop.f32.mrf.mxu0
      %1334 = vmatprep.mubr.bf16.mxu0 0
      %1335 = vmatmul.mubr.bf16.gmra.mxu0 %v1164
      %v1336 = vpop.f32.mrf.mxu0
      %v1337 = vadd.f32 %v1212, %v1336
      %v1338 = vpop.f32.mrf.mxu0
      %v1339 = vpop.f32.mrf.mxu0
      %v1340 = vadd.f32 %v1212, %v1339
      %v1341 = vpop.f32.mrf.mxu0
      %1342 = vmatprep.mubr.bf16.mxu0 0
      %1343 = vmatmul.mubr.bf16.gmra.mxu0 %v1165
      %v1344 = vpop.f32.mrf.mxu0
      %v1345 = vadd.f32 %v1212, %v1344
      %v1346 = vpop.f32.mrf.mxu0
      %v1347 = vpop.f32.mrf.mxu0
      %v1348 = vadd.f32 %v1212, %v1347
      %v1349 = vpop.f32.mrf.mxu0
      %1350 = vmatprep.mubr.bf16.mxu0 0
      %1351 = vmatmul.mubr.bf16.gmra.mxu0 %v1166
      %v1352 = vpop.f32.mrf.mxu0
      %v1353 = vadd.f32 %v1212, %v1352
      %v1354 = vpop.f32.mrf.mxu0
      %v1355 = vpop.f32.mrf.mxu0
      %v1356 = vadd.f32 %v1212, %v1355
      %v1357 = vpop.f32.mrf.mxu0
      %1358 = vmatprep.mubr.bf16.mxu0 0
      %1359 = vmatmul.mubr.bf16.gmra.mxu0 %v1167
      %v1360 = vpop.f32.mrf.mxu0
      %v1361 = vadd.f32 %v1212, %v1360
      %v1362 = vpop.f32.mrf.mxu0
      %v1363 = vpop.f32.mrf.mxu0
      %v1364 = vadd.f32 %v1212, %v1363
      %v1365 = vpop.f32.mrf.mxu0
      %1366 = vmatprep.mubr.bf16.mxu0 0
      %1367 = vmatmul.mubr.bf16.gmra.mxu0 %v1168
      %v1368 = vpop.f32.mrf.mxu0
      %v1369 = vadd.f32 %v1212, %v1368
      %v1370 = vpop.f32.mrf.mxu0
      %v1371 = vpop.f32.mrf.mxu0
      %v1372 = vadd.f32 %v1212, %v1371
      %v1373 = vpop.f32.mrf.mxu0
      %1374 = vmatprep.mubr.bf16.mxu0 0
      %1375 = vmatmul.mubr.bf16.gmra.mxu0 %v1169
      %v1376 = vpop.f32.mrf.mxu0
      %v1377 = vadd.f32 %v1212, %v1376
      %v1378 = vpop.f32.mrf.mxu0
      %v1379 = vpop.f32.mrf.mxu0
      %v1380 = vadd.f32 %v1212, %v1379
      %v1381 = vpop.f32.mrf.mxu0
      %1382 = vmatprep.mubr.bf16.mxu0 0
      %1383 = vmatmul.mubr.bf16.gmra.mxu0 %v1170
      %v1384 = vpop.f32.mrf.mxu0
      %v1385 = vadd.f32 %v1212, %v1384
      %v1386 = vpop.f32.mrf.mxu0
      %v1387 = vpop.f32.mrf.mxu0
      %v1388 = vadd.f32 %v1212, %v1387
      %v1389 = vpop.f32.mrf.mxu0
      %1390 = vmatprep.mubr.bf16.mxu0 0
      %1391 = vmatmul.mubr.bf16.gmra.mxu0 %v1171
      %v1392 = vpop.f32.mrf.mxu0
      %v1393 = vadd.f32 %v1212, %v1392
      %v1394 = vpop.f32.mrf.mxu0
      %v1395 = vpop.f32.mrf.mxu0
      %v1396 = vadd.f32 %v1212, %v1395
      %v1397 = vpop.f32.mrf.mxu0
      %1398 = vmatprep.mubr.bf16.mxu0 0
      %1399 = vmatmul.mubr.bf16.gmra.mxu0 %v1172
      %v1400 = vpop.f32.mrf.mxu0
      %v1401 = vadd.f32 %v1212, %v1400
      %v1402 = vpop.f32.mrf.mxu0
      %v1403 = vpop.f32.mrf.mxu0
      %v1404 = vadd.f32 %v1212, %v1403
      %v1405 = vpop.f32.mrf.mxu0
      %1406 = vmatprep.mubr.bf16.mxu0 0
      %1407 = vmatmul.mubr.bf16.gmra.mxu0 %v1173
      %v1408 = vpop.f32.mrf.mxu0
      %v1409 = vadd.f32 %v1212, %v1408
      %v1410 = vpop.f32.mrf.mxu0
      %v1411 = vpop.f32.mrf.mxu0
      %v1412 = vadd.f32 %v1212, %v1411
      %v1413 = vpop.f32.mrf.mxu0
      %1414 = vmatprep.mubr.bf16.mxu0 0
      %1415 = vmatmul.mubr.bf16.gmra.mxu0 %v1174
      %v1416 = vpop.f32.mrf.mxu0
      %v1417 = vadd.f32 %v1212, %v1416
      %v1418 = vpop.f32.mrf.mxu0
      %v1419 = vpop.f32.mrf.mxu0
      %v1420 = vadd.f32 %v1212, %v1419
      %v1421 = vpop.f32.mrf.mxu0
      %1422 = vmatprep.mubr.bf16.mxu0 0
      %1423 = vmatmul.mubr.bf16.gmra.mxu0 %v1175
      %v1424 = vpop.f32.mrf.mxu0
      %v1425 = vadd.f32 %v1212, %v1424
      %v1426 = vpop.f32.mrf.mxu0
      %v1427 = vpop.f32.mrf.mxu0
      %v1428 = vadd.f32 %v1212, %v1427
      %v1429 = vpop.f32.mrf.mxu0
      %1430 = vmatprep.mubr.bf16.mxu0 0
      %1431 = vmatmul.mubr.bf16.gmra.mxu0 %v1176
      %v1432 = vpop.f32.mrf.mxu0
      %v1433 = vadd.f32 %v1212, %v1432
      %v1434 = vpop.f32.mrf.mxu0
      %v1435 = vpop.f32.mrf.mxu0
      %v1436 = vadd.f32 %v1212, %v1435
      %v1437 = vpop.f32.mrf.mxu0
      %1438 = vmatprep.mubr.bf16.mxu0 0
      %1439 = vmatmul.mubr.bf16.gmra.mxu0 %v1177
      %v1440 = vpop.f32.mrf.mxu0
      %v1441 = vadd.f32 %v1212, %v1440
      %v1442 = vpop.f32.mrf.mxu0
      %v1443 = vpop.f32.mrf.mxu0
      %v1444 = vadd.f32 %v1212, %v1443
      %v1445 = vpop.f32.mrf.mxu0
      %1446 = vmatprep.mubr.bf16.mxu0 0
      %1447 = vmatmul.mubr.bf16.gmra.mxu0 %v1178
      %v1448 = vpop.f32.mrf.mxu0
      %v1449 = vadd.f32 %v1212, %v1448
      %v1450 = vpop.f32.mrf.mxu0
      %v1451 = vpop.f32.mrf.mxu0
      %v1452 = vadd.f32 %v1212, %v1451
      %v1453 = vpop.f32.mrf.mxu0
      %1454 = vmatprep.mubr.bf16.mxu0 0
      %1455 = vmatmul.mubr.bf16.gmra.mxu0 %v1179
      %v1456 = vpop.f32.mrf.mxu0
      %v1457 = vadd.f32 %v1212, %v1456
      %v1458 = vpop.f32.mrf.mxu0
      %v1459 = vpop.f32.mrf.mxu0
      %v1460 = vadd.f32 %v1212, %v1459
      %v1461 = vpop.f32.mrf.mxu0
      %1462 = vmatprep.mubr.bf16.mxu0 0
      %1463 = vmatmul.mubr.bf16.gmra.mxu0 %v1180
      %v1464 = vpop.f32.mrf.mxu0
      %v1465 = vadd.f32 %v1212, %v1464
      %v1466 = vpop.f32.mrf.mxu0
      %v1467 = vpop.f32.mrf.mxu0
      %v1468 = vadd.f32 %v1212, %v1467
      %v1469 = vpop.f32.mrf.mxu0
      %1470 = vmatprep.mubr.bf16.mxu0 0
      %1471 = vmatmul.mubr.bf16.gmra.mxu0 %v1181
      %v1472 = vpop.f32.mrf.mxu0
      %v1473 = vadd.f32 %v1212, %v1472
      %v1474 = vpop.f32.mrf.mxu0
      %v1475 = vpop.f32.mrf.mxu0
      %v1476 = vadd.f32 %v1212, %v1475
      %v1477 = vpop.f32.mrf.mxu0
      %1478 = vmatprep.mubr.bf16.mxu0 0
      %1479 = vmatmul.mubr.bf16.gmra.mxu0 %v1182
      %v1480 = vpop.f32.mrf.mxu0
      %v1481 = vadd.f32 %v1212, %v1480
      %v1482 = vpop.f32.mrf.mxu0
      %v1483 = vpop.f32.mrf.mxu0
      %v1484 = vadd.f32 %v1212, %v1483
      %v1485 = vpop.f32.mrf.mxu0
      %1486 = vmatprep.mubr.bf16.mxu0 0
      %1487 = vmatmul.mubr.bf16.gmra.mxu0 %v1183
      %v1488 = vpop.f32.mrf.mxu0
      %v1489 = vadd.f32 %v1212, %v1488
      %v1490 = vpop.f32.mrf.mxu0
      %v1491 = vpop.f32.mrf.mxu0
      %v1492 = vadd.f32 %v1212, %v1491
      %v1493 = vpop.f32.mrf.mxu0
      %1494 = vmatprep.mubr.bf16.mxu0 0
      %1495 = vmatmul.mubr.bf16.gmra.mxu0 %v1184
      %v1496 = vpop.f32.mrf.mxu0
      %v1497 = vadd.f32 %v1212, %v1496
      %v1498 = vpop.f32.mrf.mxu0
      %v1499 = vpop.f32.mrf.mxu0
      %v1500 = vadd.f32 %v1212, %v1499
      %v1501 = vpop.f32.mrf.mxu0
      %1502 = vmatprep.mubr.bf16.mxu0 0
      %1503 = vmatmul.mubr.bf16.gmra.mxu0 %v1185
      %v1504 = vpop.f32.mrf.mxu0
      %v1505 = vadd.f32 %v1212, %v1504
      %v1506 = vpop.f32.mrf.mxu0
      %v1507 = vpop.f32.mrf.mxu0
      %v1508 = vadd.f32 %v1212, %v1507
      %v1509 = vpop.f32.mrf.mxu0
      %1510 = vmatprep.mubr.bf16.mxu0 0
      %1511 = vmatmul.mubr.bf16.gmra.mxu0 %v1186
      %v1512 = vpop.f32.mrf.mxu0
      %v1513 = vadd.f32 %v1212, %v1512
      %v1514 = vpop.f32.mrf.mxu0
      %v1515 = vpop.f32.mrf.mxu0
      %v1516 = vadd.f32 %v1212, %v1515
      %v1517 = vpop.f32.mrf.mxu0
      %1518 = vmatprep.mubr.bf16.mxu0 0
      %1519 = vmatmul.mubr.bf16.gmra.mxu0 %v1187
      %v1520 = vpop.f32.mrf.mxu0
      %v1521 = vadd.f32 %v1212, %v1520
      %v1522 = vpop.f32.mrf.mxu0
      %v1523 = vpop.f32.mrf.mxu0
      %v1524 = vadd.f32 %v1212, %v1523
      %v1525 = vpop.f32.mrf.mxu0
      %1526 = vmatprep.mubr.bf16.mxu0 0
      %1527 = vmatmul.mubr.bf16.gmra.mxu0 %v1188
      %v1528 = vpop.f32.mrf.mxu0
      %v1529 = vadd.f32 %v1212, %v1528
      %v1530 = vpop.f32.mrf.mxu0
      %v1531 = vpop.f32.mrf.mxu0
      %v1532 = vadd.f32 %v1212, %v1531
      %v1533 = vpop.f32.mrf.mxu0
      %1534 = vmatprep.mubr.bf16.mxu0 0
      %1535 = vmatmul.mubr.bf16.gmra.mxu0 %v1189
      %v1536 = vpop.f32.mrf.mxu0
      %v1537 = vadd.f32 %v1212, %v1536
      %v1538 = vpop.f32.mrf.mxu0
      %v1539 = vpop.f32.mrf.mxu0
      %v1540 = vadd.f32 %v1212, %v1539
      %v1541 = vpop.f32.mrf.mxu0
      %1542 = vmatprep.mubr.bf16.mxu0 0
      %1543 = vmatmul.mubr.bf16.gmra.mxu0 %v1190
      %v1544 = vpop.f32.mrf.mxu0
      %v1545 = vadd.f32 %v1212, %v1544
      %v1546 = vpop.f32.mrf.mxu0
      %v1547 = vpop.f32.mrf.mxu0
      %v1548 = vadd.f32 %v1212, %v1547
      %v1549 = vpop.f32.mrf.mxu0
      %1550 = vdwg.mxu0
      %v1551 = vmax.f32 %v1297, 0.0
      %v1552 = vmax.f32 %v1300, 0.0
      %v1553 = vmax.f32 %v1305, 0.0
      %v1554 = vmax.f32 %v1308, 0.0
      %v1555 = vmax.f32 %v1313, 0.0
      %v1556 = vmax.f32 %v1316, 0.0
      %v1557 = vmax.f32 %v1321, 0.0
      %v1558 = vmax.f32 %v1324, 0.0
      %v1559 = vmax.f32 %v1329, 0.0
      %v1560 = vmax.f32 %v1332, 0.0
      %v1561 = vmax.f32 %v1337, 0.0
      %v1562 = vmax.f32 %v1340, 0.0
      %v1563 = vmax.f32 %v1345, 0.0
      %v1564 = vmax.f32 %v1348, 0.0
      %v1565 = vmax.f32 %v1353, 0.0
      %v1566 = vmax.f32 %v1356, 0.0
      %v1567 = vmax.f32 %v1361, 0.0
      %v1568 = vmax.f32 %v1364, 0.0
      %v1569 = vmax.f32 %v1369, 0.0
      %v1570 = vmax.f32 %v1372, 0.0
      %v1571 = vmax.f32 %v1377, 0.0
      %v1572 = vmax.f32 %v1380, 0.0
      %v1573 = vmax.f32 %v1385, 0.0
      %v1574 = vmax.f32 %v1388, 0.0
      %v1575 = vmax.f32 %v1393, 0.0
      %v1576 = vmax.f32 %v1396, 0.0
      %v1577 = vmax.f32 %v1401, 0.0
      %v1578 = vmax.f32 %v1404, 0.0
      %v1579 = vmax.f32 %v1409, 0.0
      %v1580 = vmax.f32 %v1412, 0.0
      %v1581 = vmax.f32 %v1417, 0.0
      %v1582 = vmax.f32 %v1420, 0.0
      %v1583 = vmax.f32 %v1425, 0.0
      %v1584 = vmax.f32 %v1428, 0.0
      %v1585 = vmax.f32 %v1433, 0.0
      %v1586 = vmax.f32 %v1436, 0.0
      %v1587 = vmax.f32 %v1441, 0.0
      %v1588 = vmax.f32 %v1444, 0.0
      %v1589 = vmax.f32 %v1449, 0.0
      %v1590 = vmax.f32 %v1452, 0.0
      %v1591 = vmax.f32 %v1457, 0.0
      %v1592 = vmax.f32 %v1460, 0.0
      %v1593 = vmax.f32 %v1465, 0.0
      %v1594 = vmax.f32 %v1468, 0.0
      %v1595 = vmax.f32 %v1473, 0.0
      %v1596 = vmax.f32 %v1476, 0.0
      %v1597 = vmax.f32 %v1481, 0.0
      %v1598 = vmax.f32 %v1484, 0.0
      %v1599 = vmax.f32 %v1489, 0.0
      %v1600 = vmax.f32 %v1492, 0.0
      %v1601 = vmax.f32 %v1497, 0.0
      %v1602 = vmax.f32 %v1500, 0.0
      %v1603 = vmax.f32 %v1505, 0.0
      %v1604 = vmax.f32 %v1508, 0.0
      %v1605 = vmax.f32 %v1513, 0.0
      %v1606 = vmax.f32 %v1516, 0.0
      %v1607 = vmax.f32 %v1521, 0.0
      %v1608 = vmax.f32 %v1524, 0.0
      %v1609 = vmax.f32 %v1529, 0.0
      %v1610 = vmax.f32 %v1532, 0.0
      %v1611 = vmax.f32 %v1537, 0.0
      %v1612 = vmax.f32 %v1540, 0.0
      %v1613 = vmax.f32 %v1545, 0.0
      %v1614 = vmax.f32 %v1548, 0.0
      %v1615 = vpack.c.bf16 %v1552, %v1551
      %v1616 = vpack.c.bf16 %v1554, %v1553
      %v1617 = vpack.c.bf16 %v1556, %v1555
      %v1618 = vpack.c.bf16 %v1558, %v1557
      %v1619 = vpack.c.bf16 %v1560, %v1559
      %v1620 = vpack.c.bf16 %v1562, %v1561
      %v1621 = vpack.c.bf16 %v1564, %v1563
      %v1622 = vpack.c.bf16 %v1566, %v1565
      %v1623 = vpack.c.bf16 %v1568, %v1567
      %v1624 = vpack.c.bf16 %v1570, %v1569
      %v1625 = vpack.c.bf16 %v1572, %v1571
      %v1626 = vpack.c.bf16 %v1574, %v1573
      %v1627 = vpack.c.bf16 %v1576, %v1575
      %v1628 = vpack.c.bf16 %v1578, %v1577
      %v1629 = vpack.c.bf16 %v1580, %v1579
      %v1630 = vpack.c.bf16 %v1582, %v1581
      %v1631 = vpack.c.bf16 %v1584, %v1583
      %v1632 = vpack.c.bf16 %v1586, %v1585
      %v1633 = vpack.c.bf16 %v1588, %v1587
      %v1634 = vpack.c.bf16 %v1590, %v1589
      %v1635 = vpack.c.bf16 %v1592, %v1591
      %v1636 = vpack.c.bf16 %v1594, %v1593
      %v1637 = vpack.c.bf16 %v1596, %v1595
      %v1638 = vpack.c.bf16 %v1598, %v1597
      %v1639 = vpack.c.bf16 %v1600, %v1599
      %v1640 = vpack.c.bf16 %v1602, %v1601
      %v1641 = vpack.c.bf16 %v1604, %v1603
      %v1642 = vpack.c.bf16 %v1606, %v1605
      %v1643 = vpack.c.bf16 %v1608, %v1607
      %v1644 = vpack.c.bf16 %v1610, %v1609
      %v1645 = vpack.c.bf16 %v1612, %v1611
      %v1646 = vpack.c.bf16 %v1614, %v1613
      %v1647 = vld [vmem:[%s6] sm:$0xf]
      %v1648 = vld [vmem:[%s6 + $0x4] sm:$0xf]
      %v1649 = vld [vmem:[%s6 + $0x8] sm:$0xf]
      %v1650 = vld [vmem:[%s6 + $0xc] sm:$0xf]
      %v1651 = vld [vmem:[%s6 + $0x10] sm:$0xf]
      %v1652 = vld [vmem:[%s6 + $0x14] sm:$0xf]
      %v1653 = vld [vmem:[%s6 + $0x18] sm:$0xf]
      %v1654 = vld [vmem:[%s6 + $0x1c] sm:$0xf]
      %v1655 = vld [vmem:[%s6 + $0x20] sm:$0xf]
      %v1656 = vld [vmem:[%s6 + $0x24] sm:$0xf]
      %v1657 = vld [vmem:[%s6 + $0x28] sm:$0xf]
      %v1658 = vld [vmem:[%s6 + $0x2c] sm:$0xf]
      %v1659 = vld [vmem:[%s6 + $0x30] sm:$0xf]
      %v1660 = vld [vmem:[%s6 + $0x34] sm:$0xf]
      %v1661 = vld [vmem:[%s6 + $0x38] sm:$0xf]
      %v1662 = vld [vmem:[%s6 + $0x3c] sm:$0xf]
      %v1663 = vld [vmem:[#allocation2] sm:$0x1]
      %v1665 = vlaneseq
      %v1666 = vshrl.u32 %v1665, 7
      %v1667 = vsub.s32 0, %v1666
      %v1668 = vrot.slane %v1663, %v1667
      %v1686 = vunpack.c.l.b16 %v1647
      %v1687 = vunpack.c.l.b16 %v1648
      %v1688 = vunpack.c.l.b16 %v1649
      %v1689 = vunpack.c.l.b16 %v1650
      %v1690 = vunpack.c.l.b16 %v1651
      %v1691 = vunpack.c.l.b16 %v1652
      %v1692 = vunpack.c.l.b16 %v1653
      %v1693 = vunpack.c.l.b16 %v1654
      %v1694 = vunpack.c.l.b16 %v1655
      %v1695 = vunpack.c.l.b16 %v1656
      %v1696 = vunpack.c.l.b16 %v1657
      %v1697 = vunpack.c.l.b16 %v1658
      %v1698 = vunpack.c.l.b16 %v1659
      %v1699 = vunpack.c.l.b16 %v1660
      %v1700 = vunpack.c.l.b16 %v1661
      %v1701 = vunpack.c.l.b16 %v1662
      %v1702 = vpack.c.b16 %v1687, %v1686
      %v1703 = vpack.c.b16 %v1689, %v1688
      %v1704 = vpack.c.b16 %v1691, %v1690
      %v1705 = vpack.c.b16 %v1693, %v1692
      %v1706 = vpack.c.b16 %v1695, %v1694
      %v1707 = vpack.c.b16 %v1697, %v1696
      %v1708 = vpack.c.b16 %v1699, %v1698
      %v1709 = vpack.c.b16 %v1701, %v1700
      %1718 = vmatprep.subr.bf16.mxu0 0
      %1719 = vmatpush1.bf16.msra.mxu0 %v1709
      %1720 = vmatprep.subr.bf16.mxu0 0
      %1721 = vmatpush1.bf16.msra.mxu0 %v1708
      %1722 = vmatprep.subr.bf16.mxu0 0
      %1723 = vmatpush1.bf16.msra.mxu0 %v1707
      %1724 = vmatprep.subr.bf16.mxu0 0
      %1725 = vmatpush1.bf16.msra.mxu0 %v1706
      %1726 = vmatprep.subr.bf16.mxu0 0
      %1727 = vmatpush1.bf16.msra.mxu0 %v1705
      %1728 = vmatprep.subr.bf16.mxu0 0
      %1729 = vmatpush1.bf16.msra.mxu0 %v1704
      %1730 = vmatprep.subr.bf16.mxu0 0
      %1731 = vmatpush1.bf16.msra.mxu0 %v1703
      %1732 = vmatprep.subr.bf16.mxu0 0
      %1733 = vmatpush1.bf16.msra.mxu0 %v1702
      %1734 = vmatprep.subr.bf16.mxu0 0
      %1735 = vmatpush2.bf16.msra.mxu0 0
      %1736 = vmatprep.subr.bf16.mxu0 0
      %1737 = vmatpush2.bf16.msra.mxu0 0
      %1738 = vmatprep.subr.bf16.mxu0 0
      %1739 = vmatpush2.bf16.msra.mxu0 0
      %1740 = vmatprep.subr.bf16.mxu0 0
      %1741 = vmatpush2.bf16.msra.mxu0 0
      %1742 = vmatprep.subr.bf16.mxu0 0
      %1743 = vmatpush2.bf16.msra.mxu0 0
      %1744 = vmatprep.subr.bf16.mxu0 0
      %1745 = vmatpush2.bf16.msra.mxu0 0
      %1746 = vmatprep.subr.bf16.mxu0 0
      %1747 = vmatpush2.bf16.msra.mxu0 0
      %1748 = vmatprep.subr.bf16.mxu0 0
      %1749 = vmatpush2.bf16.msra.mxu0 0
      %1750 = vmatprep.mubr.bf16.mxu0 0
      %1751 = vmatmul.mubr.bf16.gmra.mxu0 %v1615
      %v1752 = vpop.f32.mrf.mxu0
      %v1753 = vadd.f32 %v1668, %v1752
      %v1754 = vpop.f32.mrf.mxu0
      %v1755 = vpop.f32.mrf.mxu0
      %v1756 = vadd.f32 %v1668, %v1755
      %v1757 = vpop.f32.mrf.mxu0
      %1758 = vmatprep.mubr.bf16.mxu0 0
      %1759 = vmatmul.mubr.bf16.gmra.mxu0 %v1616
      %v1760 = vpop.f32.mrf.mxu0
      %v1761 = vadd.f32 %v1668, %v1760
      %v1762 = vpop.f32.mrf.mxu0
      %v1763 = vpop.f32.mrf.mxu0
      %v1764 = vadd.f32 %v1668, %v1763
      %v1765 = vpop.f32.mrf.mxu0
      %1766 = vmatprep.mubr.bf16.mxu0 0
      %1767 = vmatmul.mubr.bf16.gmra.mxu0 %v1617
      %v1768 = vpop.f32.mrf.mxu0
      %v1769 = vadd.f32 %v1668, %v1768
      %v1770 = vpop.f32.mrf.mxu0
      %v1771 = vpop.f32.mrf.mxu0
      %v1772 = vadd.f32 %v1668, %v1771
      %v1773 = vpop.f32.mrf.mxu0
      %1774 = vmatprep.mubr.bf16.mxu0 0
      %1775 = vmatmul.mubr.bf16.gmra.mxu0 %v1618
      %v1776 = vpop.f32.mrf.mxu0
      %v1777 = vadd.f32 %v1668, %v1776
      %v1778 = vpop.f32.mrf.mxu0
      %v1779 = vpop.f32.mrf.mxu0
      %v1780 = vadd.f32 %v1668, %v1779
      %v1781 = vpop.f32.mrf.mxu0
      %1782 = vmatprep.mubr.bf16.mxu0 0
      %1783 = vmatmul.mubr.bf16.gmra.mxu0 %v1619
      %v1784 = vpop.f32.mrf.mxu0
      %v1785 = vadd.f32 %v1668, %v1784
      %v1786 = vpop.f32.mrf.mxu0
      %v1787 = vpop.f32.mrf.mxu0
      %v1788 = vadd.f32 %v1668, %v1787
      %v1789 = vpop.f32.mrf.mxu0
      %1790 = vmatprep.mubr.bf16.mxu0 0
      %1791 = vmatmul.mubr.bf16.gmra.mxu0 %v1620
      %v1792 = vpop.f32.mrf.mxu0
      %v1793 = vadd.f32 %v1668, %v1792
      %v1794 = vpop.f32.mrf.mxu0
      %v1795 = vpop.f32.mrf.mxu0
      %v1796 = vadd.f32 %v1668, %v1795
      %v1797 = vpop.f32.mrf.mxu0
      %1798 = vmatprep.mubr.bf16.mxu0 0
      %1799 = vmatmul.mubr.bf16.gmra.mxu0 %v1621
      %v1800 = vpop.f32.mrf.mxu0
      %v1801 = vadd.f32 %v1668, %v1800
      %v1802 = vpop.f32.mrf.mxu0
      %v1803 = vpop.f32.mrf.mxu0
      %v1804 = vadd.f32 %v1668, %v1803
      %v1805 = vpop.f32.mrf.mxu0
      %1806 = vmatprep.mubr.bf16.mxu0 0
      %1807 = vmatmul.mubr.bf16.gmra.mxu0 %v1622
      %v1808 = vpop.f32.mrf.mxu0
      %v1809 = vadd.f32 %v1668, %v1808
      %v1810 = vpop.f32.mrf.mxu0
      %v1811 = vpop.f32.mrf.mxu0
      %v1812 = vadd.f32 %v1668, %v1811
      %v1813 = vpop.f32.mrf.mxu0
      %1814 = vmatprep.mubr.bf16.mxu0 0
      %1815 = vmatmul.mubr.bf16.gmra.mxu0 %v1623
      %v1816 = vpop.f32.mrf.mxu0
      %v1817 = vadd.f32 %v1668, %v1816
      %v1818 = vpop.f32.mrf.mxu0
      %v1819 = vpop.f32.mrf.mxu0
      %v1820 = vadd.f32 %v1668, %v1819
      %v1821 = vpop.f32.mrf.mxu0
      %1822 = vmatprep.mubr.bf16.mxu0 0
      %1823 = vmatmul.mubr.bf16.gmra.mxu0 %v1624
      %v1824 = vpop.f32.mrf.mxu0
      %v1825 = vadd.f32 %v1668, %v1824
      %v1826 = vpop.f32.mrf.mxu0
      %v1827 = vpop.f32.mrf.mxu0
      %v1828 = vadd.f32 %v1668, %v1827
      %v1829 = vpop.f32.mrf.mxu0
      %1830 = vmatprep.mubr.bf16.mxu0 0
      %1831 = vmatmul.mubr.bf16.gmra.mxu0 %v1625
      %v1832 = vpop.f32.mrf.mxu0
      %v1833 = vadd.f32 %v1668, %v1832
      %v1834 = vpop.f32.mrf.mxu0
      %v1835 = vpop.f32.mrf.mxu0
      %v1836 = vadd.f32 %v1668, %v1835
      %v1837 = vpop.f32.mrf.mxu0
      %1838 = vmatprep.mubr.bf16.mxu0 0
      %1839 = vmatmul.mubr.bf16.gmra.mxu0 %v1626
      %v1840 = vpop.f32.mrf.mxu0
      %v1841 = vadd.f32 %v1668, %v1840
      %v1842 = vpop.f32.mrf.mxu0
      %v1843 = vpop.f32.mrf.mxu0
      %v1844 = vadd.f32 %v1668, %v1843
      %v1845 = vpop.f32.mrf.mxu0
      %1846 = vmatprep.mubr.bf16.mxu0 0
      %1847 = vmatmul.mubr.bf16.gmra.mxu0 %v1627
      %v1848 = vpop.f32.mrf.mxu0
      %v1849 = vadd.f32 %v1668, %v1848
      %v1850 = vpop.f32.mrf.mxu0
      %v1851 = vpop.f32.mrf.mxu0
      %v1852 = vadd.f32 %v1668, %v1851
      %v1853 = vpop.f32.mrf.mxu0
      %1854 = vmatprep.mubr.bf16.mxu0 0
      %1855 = vmatmul.mubr.bf16.gmra.mxu0 %v1628
      %v1856 = vpop.f32.mrf.mxu0
      %v1857 = vadd.f32 %v1668, %v1856
      %v1858 = vpop.f32.mrf.mxu0
      %v1859 = vpop.f32.mrf.mxu0
      %v1860 = vadd.f32 %v1668, %v1859
      %v1861 = vpop.f32.mrf.mxu0
      %1862 = vmatprep.mubr.bf16.mxu0 0
      %1863 = vmatmul.mubr.bf16.gmra.mxu0 %v1629
      %v1864 = vpop.f32.mrf.mxu0
      %v1865 = vadd.f32 %v1668, %v1864
      %v1866 = vpop.f32.mrf.mxu0
      %v1867 = vpop.f32.mrf.mxu0
      %v1868 = vadd.f32 %v1668, %v1867
      %v1869 = vpop.f32.mrf.mxu0
      %1870 = vmatprep.mubr.bf16.mxu0 0
      %1871 = vmatmul.mubr.bf16.gmra.mxu0 %v1630
      %v1872 = vpop.f32.mrf.mxu0
      %v1873 = vadd.f32 %v1668, %v1872
      %v1874 = vpop.f32.mrf.mxu0
      %v1875 = vpop.f32.mrf.mxu0
      %v1876 = vadd.f32 %v1668, %v1875
      %v1877 = vpop.f32.mrf.mxu0
      %1878 = vmatprep.mubr.bf16.mxu0 0
      %1879 = vmatmul.mubr.bf16.gmra.mxu0 %v1631
      %v1880 = vpop.f32.mrf.mxu0
      %v1881 = vadd.f32 %v1668, %v1880
      %v1882 = vpop.f32.mrf.mxu0
      %v1883 = vpop.f32.mrf.mxu0
      %v1884 = vadd.f32 %v1668, %v1883
      %v1885 = vpop.f32.mrf.mxu0
      %1886 = vmatprep.mubr.bf16.mxu0 0
      %1887 = vmatmul.mubr.bf16.gmra.mxu0 %v1632
      %v1888 = vpop.f32.mrf.mxu0
      %v1889 = vadd.f32 %v1668, %v1888
      %v1890 = vpop.f32.mrf.mxu0
      %v1891 = vpop.f32.mrf.mxu0
      %v1892 = vadd.f32 %v1668, %v1891
      %v1893 = vpop.f32.mrf.mxu0
      %1894 = vmatprep.mubr.bf16.mxu0 0
      %1895 = vmatmul.mubr.bf16.gmra.mxu0 %v1633
      %v1896 = vpop.f32.mrf.mxu0
      %v1897 = vadd.f32 %v1668, %v1896
      %v1898 = vpop.f32.mrf.mxu0
      %v1899 = vpop.f32.mrf.mxu0
      %v1900 = vadd.f32 %v1668, %v1899
      %v1901 = vpop.f32.mrf.mxu0
      %1902 = vmatprep.mubr.bf16.mxu0 0
      %1903 = vmatmul.mubr.bf16.gmra.mxu0 %v1634
      %v1904 = vpop.f32.mrf.mxu0
      %v1905 = vadd.f32 %v1668, %v1904
      %v1906 = vpop.f32.mrf.mxu0
      %v1907 = vpop.f32.mrf.mxu0
      %v1908 = vadd.f32 %v1668, %v1907
      %v1909 = vpop.f32.mrf.mxu0
      %1910 = vmatprep.mubr.bf16.mxu0 0
      %1911 = vmatmul.mubr.bf16.gmra.mxu0 %v1635
      %v1912 = vpop.f32.mrf.mxu0
      %v1913 = vadd.f32 %v1668, %v1912
      %v1914 = vpop.f32.mrf.mxu0
      %v1915 = vpop.f32.mrf.mxu0
      %v1916 = vadd.f32 %v1668, %v1915
      %v1917 = vpop.f32.mrf.mxu0
      %1918 = vmatprep.mubr.bf16.mxu0 0
      %1919 = vmatmul.mubr.bf16.gmra.mxu0 %v1636
      %v1920 = vpop.f32.mrf.mxu0
      %v1921 = vadd.f32 %v1668, %v1920
      %v1922 = vpop.f32.mrf.mxu0
      %v1923 = vpop.f32.mrf.mxu0
      %v1924 = vadd.f32 %v1668, %v1923
      %v1925 = vpop.f32.mrf.mxu0
      %1926 = vmatprep.mubr.bf16.mxu0 0
      %1927 = vmatmul.mubr.bf16.gmra.mxu0 %v1637
      %v1928 = vpop.f32.mrf.mxu0
      %v1929 = vadd.f32 %v1668, %v1928
      %v1930 = vpop.f32.mrf.mxu0
      %v1931 = vpop.f32.mrf.mxu0
      %v1932 = vadd.f32 %v1668, %v1931
      %v1933 = vpop.f32.mrf.mxu0
      %1934 = vmatprep.mubr.bf16.mxu0 0
      %1935 = vmatmul.mubr.bf16.gmra.mxu0 %v1638
      %v1936 = vpop.f32.mrf.mxu0
      %v1937 = vadd.f32 %v1668, %v1936
      %v1938 = vpop.f32.mrf.mxu0
      %v1939 = vpop.f32.mrf.mxu0
      %v1940 = vadd.f32 %v1668, %v1939
      %v1941 = vpop.f32.mrf.mxu0
      %1942 = vmatprep.mubr.bf16.mxu0 0
      %1943 = vmatmul.mubr.bf16.gmra.mxu0 %v1639
      %v1944 = vpop.f32.mrf.mxu0
      %v1945 = vadd.f32 %v1668, %v1944
      %v1946 = vpop.f32.mrf.mxu0
      %v1947 = vpop.f32.mrf.mxu0
      %v1948 = vadd.f32 %v1668, %v1947
      %v1949 = vpop.f32.mrf.mxu0
      %1950 = vmatprep.mubr.bf16.mxu0 0
      %1951 = vmatmul.mubr.bf16.gmra.mxu0 %v1640
      %v1952 = vpop.f32.mrf.mxu0
      %v1953 = vadd.f32 %v1668, %v1952
      %v1954 = vpop.f32.mrf.mxu0
      %v1955 = vpop.f32.mrf.mxu0
      %v1956 = vadd.f32 %v1668, %v1955
      %v1957 = vpop.f32.mrf.mxu0
      %1958 = vmatprep.mubr.bf16.mxu0 0
      %1959 = vmatmul.mubr.bf16.gmra.mxu0 %v1641
      %v1960 = vpop.f32.mrf.mxu0
      %v1961 = vadd.f32 %v1668, %v1960
      %v1962 = vpop.f32.mrf.mxu0
      %v1963 = vpop.f32.mrf.mxu0
      %v1964 = vadd.f32 %v1668, %v1963
      %v1965 = vpop.f32.mrf.mxu0
      %1966 = vmatprep.mubr.bf16.mxu0 0
      %1967 = vmatmul.mubr.bf16.gmra.mxu0 %v1642
      %v1968 = vpop.f32.mrf.mxu0
      %v1969 = vadd.f32 %v1668, %v1968
      %v1970 = vpop.f32.mrf.mxu0
      %v1971 = vpop.f32.mrf.mxu0
      %v1972 = vadd.f32 %v1668, %v1971
      %v1973 = vpop.f32.mrf.mxu0
      %1974 = vmatprep.mubr.bf16.mxu0 0
      %1975 = vmatmul.mubr.bf16.gmra.mxu0 %v1643
      %v1976 = vpop.f32.mrf.mxu0
      %v1977 = vadd.f32 %v1668, %v1976
      %v1978 = vpop.f32.mrf.mxu0
      %v1979 = vpop.f32.mrf.mxu0
      %v1980 = vadd.f32 %v1668, %v1979
      %v1981 = vpop.f32.mrf.mxu0
      %1982 = vmatprep.mubr.bf16.mxu0 0
      %1983 = vmatmul.mubr.bf16.gmra.mxu0 %v1644
      %v1984 = vpop.f32.mrf.mxu0
      %v1985 = vadd.f32 %v1668, %v1984
      %v1986 = vpop.f32.mrf.mxu0
      %v1987 = vpop.f32.mrf.mxu0
      %v1988 = vadd.f32 %v1668, %v1987
      %v1989 = vpop.f32.mrf.mxu0
      %1990 = vmatprep.mubr.bf16.mxu0 0
      %1991 = vmatmul.mubr.bf16.gmra.mxu0 %v1645
      %v1992 = vpop.f32.mrf.mxu0
      %v1993 = vadd.f32 %v1668, %v1992
      %v1994 = vpop.f32.mrf.mxu0
      %v1995 = vpop.f32.mrf.mxu0
      %v1996 = vadd.f32 %v1668, %v1995
      %v1997 = vpop.f32.mrf.mxu0
      %1998 = vmatprep.mubr.bf16.mxu0 0
      %1999 = vmatmul.mubr.bf16.gmra.mxu0 %v1646
      %v2000 = vpop.f32.mrf.mxu0
      %v2001 = vadd.f32 %v1668, %v2000
      %v2002 = vpop.f32.mrf.mxu0
      %v2003 = vpop.f32.mrf.mxu0
      %v2004 = vadd.f32 %v1668, %v2003
      %v2005 = vpop.f32.mrf.mxu0
      %2006 = vdwg.mxu0
      %v2007 = vxor.u32 %v1753, 2147483648
      %v2008 = vxor.u32 %v1756, 2147483648
      %v2009 = vxor.u32 %v1761, 2147483648
      %v2010 = vxor.u32 %v1764, 2147483648
      %v2011 = vxor.u32 %v1769, 2147483648
      %v2012 = vxor.u32 %v1772, 2147483648
      %v2013 = vxor.u32 %v1777, 2147483648
      %v2014 = vxor.u32 %v1780, 2147483648
      %v2015 = vxor.u32 %v1785, 2147483648
      %v2016 = vxor.u32 %v1788, 2147483648
      %v2017 = vxor.u32 %v1793, 2147483648
      %v2018 = vxor.u32 %v1796, 2147483648
      %v2019 = vxor.u32 %v1801, 2147483648
      %v2020 = vxor.u32 %v1804, 2147483648
      %v2021 = vxor.u32 %v1809, 2147483648
      %v2022 = vxor.u32 %v1812, 2147483648
      %v2023 = vxor.u32 %v1817, 2147483648
      %v2024 = vxor.u32 %v1820, 2147483648
      %v2025 = vxor.u32 %v1825, 2147483648
      %v2026 = vxor.u32 %v1828, 2147483648
      %v2027 = vxor.u32 %v1833, 2147483648
      %v2028 = vxor.u32 %v1836, 2147483648
      %v2029 = vxor.u32 %v1841, 2147483648
      %v2030 = vxor.u32 %v1844, 2147483648
      %v2031 = vxor.u32 %v1849, 2147483648
      %v2032 = vxor.u32 %v1852, 2147483648
      %v2033 = vxor.u32 %v1857, 2147483648
      %v2034 = vxor.u32 %v1860, 2147483648
      %v2035 = vxor.u32 %v1865, 2147483648
      %v2036 = vxor.u32 %v1868, 2147483648
      %v2037 = vxor.u32 %v1873, 2147483648
      %v2038 = vxor.u32 %v1876, 2147483648
      %v2039 = vxor.u32 %v1881, 2147483648
      %v2040 = vxor.u32 %v1884, 2147483648
      %v2041 = vxor.u32 %v1889, 2147483648
      %v2042 = vxor.u32 %v1892, 2147483648
      %v2043 = vxor.u32 %v1897, 2147483648
      %v2044 = vxor.u32 %v1900, 2147483648
      %v2045 = vxor.u32 %v1905, 2147483648
      %v2046 = vxor.u32 %v1908, 2147483648
      %v2047 = vxor.u32 %v1913, 2147483648
      %v2048 = vxor.u32 %v1916, 2147483648
      %v2049 = vxor.u32 %v1921, 2147483648
      %v2050 = vxor.u32 %v1924, 2147483648
      %v2051 = vxor.u32 %v1929, 2147483648
      %v2052 = vxor.u32 %v1932, 2147483648
      %v2053 = vxor.u32 %v1937, 2147483648
      %v2054 = vxor.u32 %v1940, 2147483648
      %v2055 = vxor.u32 %v1945, 2147483648
      %v2056 = vxor.u32 %v1948, 2147483648
      %v2057 = vxor.u32 %v1953, 2147483648
      %v2058 = vxor.u32 %v1956, 2147483648
      %v2059 = vxor.u32 %v1961, 2147483648
      %v2060 = vxor.u32 %v1964, 2147483648
      %v2061 = vxor.u32 %v1969, 2147483648
      %v2062 = vxor.u32 %v1972, 2147483648
      %v2063 = vxor.u32 %v1977, 2147483648
      %v2064 = vxor.u32 %v1980, 2147483648
      %v2065 = vxor.u32 %v1985, 2147483648
      %v2066 = vxor.u32 %v1988, 2147483648
      %v2067 = vxor.u32 %v1993, 2147483648
      %v2068 = vxor.u32 %v1996, 2147483648
      %v2069 = vxor.u32 %v2001, 2147483648
      %v2070 = vxor.u32 %v2004, 2147483648
      %v2071 = vmul.f32 %v2007, 1.442695
      %v2072 = vpow.pop %v2071
      %v2073 = vmul.f32 %v2008, 1.442695
      %v2074 = vpow.pop %v2073
      %v2075 = vmul.f32 %v2009, 1.442695
      %v2076 = vpow.pop %v2075
      %v2077 = vmul.f32 %v2010, 1.442695
      %v2078 = vpow.pop %v2077
      %v2079 = vmul.f32 %v2011, 1.442695
      %v2080 = vpow.pop %v2079
      %v2081 = vmul.f32 %v2012, 1.442695
      %v2082 = vpow.pop %v2081
      %v2083 = vmul.f32 %v2013, 1.442695
      %v2084 = vpow.pop %v2083
      %v2085 = vmul.f32 %v2014, 1.442695
      %v2086 = vpow.pop %v2085
      %v2087 = vmul.f32 %v2015, 1.442695
      %v2088 = vpow.pop %v2087
      %v2089 = vmul.f32 %v2016, 1.442695
      %v2090 = vpow.pop %v2089
      %v2091 = vmul.f32 %v2017, 1.442695
      %v2092 = vpow.pop %v2091
      %v2093 = vmul.f32 %v2018, 1.442695
      %v2094 = vpow.pop %v2093
      %v2095 = vmul.f32 %v2019, 1.442695
      %v2096 = vpow.pop %v2095
      %v2097 = vmul.f32 %v2020, 1.442695
      %v2098 = vpow.pop %v2097
      %v2099 = vmul.f32 %v2021, 1.442695
      %v2100 = vpow.pop %v2099
      %v2101 = vmul.f32 %v2022, 1.442695
      %v2102 = vpow.pop %v2101
      %v2103 = vmul.f32 %v2023, 1.442695
      %v2104 = vpow.pop %v2103
      %v2105 = vmul.f32 %v2024, 1.442695
      %v2106 = vpow.pop %v2105
      %v2107 = vmul.f32 %v2025, 1.442695
      %v2108 = vpow.pop %v2107
      %v2109 = vmul.f32 %v2026, 1.442695
      %v2110 = vpow.pop %v2109
      %v2111 = vmul.f32 %v2027, 1.442695
      %v2112 = vpow.pop %v2111
      %v2113 = vmul.f32 %v2028, 1.442695
      %v2114 = vpow.pop %v2113
      %v2115 = vmul.f32 %v2029, 1.442695
      %v2116 = vpow.pop %v2115
      %v2117 = vmul.f32 %v2030, 1.442695
      %v2118 = vpow.pop %v2117
      %v2119 = vmul.f32 %v2031, 1.442695
      %v2120 = vpow.pop %v2119
      %v2121 = vmul.f32 %v2032, 1.442695
      %v2122 = vpow.pop %v2121
      %v2123 = vmul.f32 %v2033, 1.442695
      %v2124 = vpow.pop %v2123
      %v2125 = vmul.f32 %v2034, 1.442695
      %v2126 = vpow.pop %v2125
      %v2127 = vmul.f32 %v2035, 1.442695
      %v2128 = vpow.pop %v2127
      %v2129 = vmul.f32 %v2036, 1.442695
      %v2130 = vpow.pop %v2129
      %v2131 = vmul.f32 %v2037, 1.442695
      %v2132 = vpow.pop %v2131
      %v2133 = vmul.f32 %v2038, 1.442695
      %v2134 = vpow.pop %v2133
      %v2135 = vmul.f32 %v2039, 1.442695
      %v2136 = vpow.pop %v2135
      %v2137 = vmul.f32 %v2040, 1.442695
      %v2138 = vpow.pop %v2137
      %v2139 = vmul.f32 %v2041, 1.442695
      %v2140 = vpow.pop %v2139
      %v2141 = vmul.f32 %v2042, 1.442695
      %v2142 = vpow.pop %v2141
      %v2143 = vmul.f32 %v2043, 1.442695
      %v2144 = vpow.pop %v2143
      %v2145 = vmul.f32 %v2044, 1.442695
      %v2146 = vpow.pop %v2145
      %v2147 = vmul.f32 %v2045, 1.442695
      %v2148 = vpow.pop %v2147
      %v2149 = vmul.f32 %v2046, 1.442695
      %v2150 = vpow.pop %v2149
      %v2151 = vmul.f32 %v2047, 1.442695
      %v2152 = vpow.pop %v2151
      %v2153 = vmul.f32 %v2048, 1.442695
      %v2154 = vpow.pop %v2153
      %v2155 = vmul.f32 %v2049, 1.442695
      %v2156 = vpow.pop %v2155
      %v2157 = vmul.f32 %v2050, 1.442695
      %v2158 = vpow.pop %v2157
      %v2159 = vmul.f32 %v2051, 1.442695
      %v2160 = vpow.pop %v2159
      %v2161 = vmul.f32 %v2052, 1.442695
      %v2162 = vpow.pop %v2161
      %v2163 = vmul.f32 %v2053, 1.442695
      %v2164 = vpow.pop %v2163
      %v2165 = vmul.f32 %v2054, 1.442695
      %v2166 = vpow.pop %v2165
      %v2167 = vmul.f32 %v2055, 1.442695
      %v2168 = vpow.pop %v2167
      %v2169 = vmul.f32 %v2056, 1.442695
      %v2170 = vpow.pop %v2169
      %v2171 = vmul.f32 %v2057, 1.442695
      %v2172 = vpow.pop %v2171
      %v2173 = vmul.f32 %v2058, 1.442695
      %v2174 = vpow.pop %v2173
      %v2175 = vmul.f32 %v2059, 1.442695
      %v2176 = vpow.pop %v2175
      %v2177 = vmul.f32 %v2060, 1.442695
      %v2178 = vpow.pop %v2177
      %v2179 = vmul.f32 %v2061, 1.442695
      %v2180 = vpow.pop %v2179
      %v2181 = vmul.f32 %v2062, 1.442695
      %v2182 = vpow.pop %v2181
      %v2183 = vmul.f32 %v2063, 1.442695
      %v2184 = vpow.pop %v2183
      %v2185 = vmul.f32 %v2064, 1.442695
      %v2186 = vpow.pop %v2185
      %v2187 = vmul.f32 %v2065, 1.442695
      %v2188 = vpow.pop %v2187
      %v2189 = vmul.f32 %v2066, 1.442695
      %v2190 = vpow.pop %v2189
      %v2191 = vmul.f32 %v2067, 1.442695
      %v2192 = vpow.pop %v2191
      %v2193 = vmul.f32 %v2068, 1.442695
      %v2194 = vpow.pop %v2193
      %v2195 = vmul.f32 %v2069, 1.442695
      %v2196 = vpow.pop %v2195
      %v2197 = vmul.f32 %v2070, 1.442695
      %v2198 = vpow.pop %v2197
      %v2199 = vadd.f32 %v2072, 1.0
      %v2200 = vadd.f32 %v2074, 1.0
      %v2201 = vadd.f32 %v2076, 1.0
      %v2202 = vadd.f32 %v2078, 1.0
      %v2203 = vadd.f32 %v2080, 1.0
      %v2204 = vadd.f32 %v2082, 1.0
      %v2205 = vadd.f32 %v2084, 1.0
      %v2206 = vadd.f32 %v2086, 1.0
      %v2207 = vadd.f32 %v2088, 1.0
      %v2208 = vadd.f32 %v2090, 1.0
      %v2209 = vadd.f32 %v2092, 1.0
      %v2210 = vadd.f32 %v2094, 1.0
      %v2211 = vadd.f32 %v2096, 1.0
      %v2212 = vadd.f32 %v2098, 1.0
      %v2213 = vadd.f32 %v2100, 1.0
      %v2214 = vadd.f32 %v2102, 1.0
      %v2215 = vadd.f32 %v2104, 1.0
      %v2216 = vadd.f32 %v2106, 1.0
      %v2217 = vadd.f32 %v2108, 1.0
      %v2218 = vadd.f32 %v2110, 1.0
      %v2219 = vadd.f32 %v2112, 1.0
      %v2220 = vadd.f32 %v2114, 1.0
      %v2221 = vadd.f32 %v2116, 1.0
      %v2222 = vadd.f32 %v2118, 1.0
      %v2223 = vadd.f32 %v2120, 1.0
      %v2224 = vadd.f32 %v2122, 1.0
      %v2225 = vadd.f32 %v2124, 1.0
      %v2226 = vadd.f32 %v2126, 1.0
      %v2227 = vadd.f32 %v2128, 1.0
      %v2228 = vadd.f32 %v2130, 1.0
      %v2229 = vadd.f32 %v2132, 1.0
      %v2230 = vadd.f32 %v2134, 1.0
      %v2231 = vadd.f32 %v2136, 1.0
      %v2232 = vadd.f32 %v2138, 1.0
      %v2233 = vadd.f32 %v2140, 1.0
      %v2234 = vadd.f32 %v2142, 1.0
      %v2235 = vadd.f32 %v2144, 1.0
      %v2236 = vadd.f32 %v2146, 1.0
      %v2237 = vadd.f32 %v2148, 1.0
      %v2238 = vadd.f32 %v2150, 1.0
      %v2239 = vadd.f32 %v2152, 1.0
      %v2240 = vadd.f32 %v2154, 1.0
      %v2241 = vadd.f32 %v2156, 1.0
      %v2242 = vadd.f32 %v2158, 1.0
      %v2243 = vadd.f32 %v2160, 1.0
      %v2244 = vadd.f32 %v2162, 1.0
      %v2245 = vadd.f32 %v2164, 1.0
      %v2246 = vadd.f32 %v2166, 1.0
      %v2247 = vadd.f32 %v2168, 1.0
      %v2248 = vadd.f32 %v2170, 1.0
      %v2249 = vadd.f32 %v2172, 1.0
      %v2250 = vadd.f32 %v2174, 1.0
      %v2251 = vadd.f32 %v2176, 1.0
      %v2252 = vadd.f32 %v2178, 1.0
      %v2253 = vadd.f32 %v2180, 1.0
      %v2254 = vadd.f32 %v2182, 1.0
      %v2255 = vadd.f32 %v2184, 1.0
      %v2256 = vadd.f32 %v2186, 1.0
      %v2257 = vadd.f32 %v2188, 1.0
      %v2258 = vadd.f32 %v2190, 1.0
      %v2259 = vadd.f32 %v2192, 1.0
      %v2260 = vadd.f32 %v2194, 1.0
      %v2261 = vadd.f32 %v2196, 1.0
      %v2262 = vadd.f32 %v2198, 1.0
      %v2263 = vrcp.pop %v2199
      %v2264 = vmul.f32 1.0, %v2263
      %v2265 = vrcp.pop %v2200
      %v2266 = vmul.f32 1.0, %v2265
      %v2267 = vrcp.pop %v2201
      %v2268 = vmul.f32 1.0, %v2267
      %v2269 = vrcp.pop %v2202
      %v2270 = vmul.f32 1.0, %v2269
      %v2271 = vrcp.pop %v2203
      %v2272 = vmul.f32 1.0, %v2271
      %v2273 = vrcp.pop %v2204
      %v2274 = vmul.f32 1.0, %v2273
      %v2275 = vrcp.pop %v2205
      %v2276 = vmul.f32 1.0, %v2275
      %v2277 = vrcp.pop %v2206
      %v2278 = vmul.f32 1.0, %v2277
      %v2279 = vrcp.pop %v2207
      %v2280 = vmul.f32 1.0, %v2279
      %v2281 = vrcp.pop %v2208
      %v2282 = vmul.f32 1.0, %v2281
      %v2283 = vrcp.pop %v2209
      %v2284 = vmul.f32 1.0, %v2283
      %v2285 = vrcp.pop %v2210
      %v2286 = vmul.f32 1.0, %v2285
      %v2287 = vrcp.pop %v2211
      %v2288 = vmul.f32 1.0, %v2287
      %v2289 = vrcp.pop %v2212
      %v2290 = vmul.f32 1.0, %v2289
      %v2291 = vrcp.pop %v2213
      %v2292 = vmul.f32 1.0, %v2291
      %v2293 = vrcp.pop %v2214
      %v2294 = vmul.f32 1.0, %v2293
      %v2295 = vrcp.pop %v2215
      %v2296 = vmul.f32 1.0, %v2295
      %v2297 = vrcp.pop %v2216
      %v2298 = vmul.f32 1.0, %v2297
      %v2299 = vrcp.pop %v2217
      %v2300 = vmul.f32 1.0, %v2299
      %v2301 = vrcp.pop %v2218
      %v2302 = vmul.f32 1.0, %v2301
      %v2303 = vrcp.pop %v2219
      %v2304 = vmul.f32 1.0, %v2303
      %v2305 = vrcp.pop %v2220
      %v2306 = vmul.f32 1.0, %v2305
      %v2307 = vrcp.pop %v2221
      %v2308 = vmul.f32 1.0, %v2307
      %v2309 = vrcp.pop %v2222
      %v2310 = vmul.f32 1.0, %v2309
      %v2311 = vrcp.pop %v2223
      %v2312 = vmul.f32 1.0, %v2311
      %v2313 = vrcp.pop %v2224
      %v2314 = vmul.f32 1.0, %v2313
      %v2315 = vrcp.pop %v2225
      %v2316 = vmul.f32 1.0, %v2315
      %v2317 = vrcp.pop %v2226
      %v2318 = vmul.f32 1.0, %v2317
      %v2319 = vrcp.pop %v2227
      %v2320 = vmul.f32 1.0, %v2319
      %v2321 = vrcp.pop %v2228
      %v2322 = vmul.f32 1.0, %v2321
      %v2323 = vrcp.pop %v2229
      %v2324 = vmul.f32 1.0, %v2323
      %v2325 = vrcp.pop %v2230
      %v2326 = vmul.f32 1.0, %v2325
      %v2327 = vrcp.pop %v2231
      %v2328 = vmul.f32 1.0, %v2327
      %v2329 = vrcp.pop %v2232
      %v2330 = vmul.f32 1.0, %v2329
      %v2331 = vrcp.pop %v2233
      %v2332 = vmul.f32 1.0, %v2331
      %v2333 = vrcp.pop %v2234
      %v2334 = vmul.f32 1.0, %v2333
      %v2335 = vrcp.pop %v2235
      %v2336 = vmul.f32 1.0, %v2335
      %v2337 = vrcp.pop %v2236
      %v2338 = vmul.f32 1.0, %v2337
      %v2339 = vrcp.pop %v2237
      %v2340 = vmul.f32 1.0, %v2339
      %v2341 = vrcp.pop %v2238
      %v2342 = vmul.f32 1.0, %v2341
      %v2343 = vrcp.pop %v2239
      %v2344 = vmul.f32 1.0, %v2343
      %v2345 = vrcp.pop %v2240
      %v2346 = vmul.f32 1.0, %v2345
      %v2347 = vrcp.pop %v2241
      %v2348 = vmul.f32 1.0, %v2347
      %v2349 = vrcp.pop %v2242
      %v2350 = vmul.f32 1.0, %v2349
      %v2351 = vrcp.pop %v2243
      %v2352 = vmul.f32 1.0, %v2351
      %v2353 = vrcp.pop %v2244
      %v2354 = vmul.f32 1.0, %v2353
      %v2355 = vrcp.pop %v2245
      %v2356 = vmul.f32 1.0, %v2355
      %v2357 = vrcp.pop %v2246
      %v2358 = vmul.f32 1.0, %v2357
      %v2359 = vrcp.pop %v2247
      %v2360 = vmul.f32 1.0, %v2359
      %v2361 = vrcp.pop %v2248
      %v2362 = vmul.f32 1.0, %v2361
      %v2363 = vrcp.pop %v2249
      %v2364 = vmul.f32 1.0, %v2363
      %v2365 = vrcp.pop %v2250
      %v2366 = vmul.f32 1.0, %v2365
      %v2367 = vrcp.pop %v2251
      %v2368 = vmul.f32 1.0, %v2367
      %v2369 = vrcp.pop %v2252
      %v2370 = vmul.f32 1.0, %v2369
      %v2371 = vrcp.pop %v2253
      %v2372 = vmul.f32 1.0, %v2371
      %v2373 = vrcp.pop %v2254
      %v2374 = vmul.f32 1.0, %v2373
      %v2375 = vrcp.pop %v2255
      %v2376 = vmul.f32 1.0, %v2375
      %v2377 = vrcp.pop %v2256
      %v2378 = vmul.f32 1.0, %v2377
      %v2379 = vrcp.pop %v2257
      %v2380 = vmul.f32 1.0, %v2379
      %v2381 = vrcp.pop %v2258
      %v2382 = vmul.f32 1.0, %v2381
      %v2383 = vrcp.pop %v2259
      %v2384 = vmul.f32 1.0, %v2383
      %v2385 = vrcp.pop %v2260
      %v2386 = vmul.f32 1.0, %v2385
      %v2387 = vrcp.pop %v2261
      %v2388 = vmul.f32 1.0, %v2387
      %v2389 = vrcp.pop %v2262
      %v2390 = vmul.f32 1.0, %v2389
      %vm2391 = vcmask 7168
      %2392 = vst.msk [vmem:[%s331] sm:$0xff] %vm2391, %v2264
      %2393 = vst.msk [vmem:[%s331 + $0x8] sm:$0xff] %vm2391, %v2266
      %2394 = vst.msk [vmem:[%s331 + $0x10] sm:$0xff] %vm2391, %v2268
      %2395 = vst.msk [vmem:[%s331 + $0x18] sm:$0xff] %vm2391, %v2270
      %2396 = vst.msk [vmem:[%s331 + $0x20] sm:$0xff] %vm2391, %v2272
      %2397 = vst.msk [vmem:[%s331 + $0x28] sm:$0xff] %vm2391, %v2274
      %2398 = vst.msk [vmem:[%s331 + $0x30] sm:$0xff] %vm2391, %v2276
      %2399 = vst.msk [vmem:[%s331 + $0x38] sm:$0xff] %vm2391, %v2278
      %2400 = vst.msk [vmem:[%s331 + $0x40] sm:$0xff] %vm2391, %v2280
      %2401 = vst.msk [vmem:[%s331 + $0x48] sm:$0xff] %vm2391, %v2282
      %2402 = vst.msk [vmem:[%s331 + $0x50] sm:$0xff] %vm2391, %v2284
      %2403 = vst.msk [vmem:[%s331 + $0x58] sm:$0xff] %vm2391, %v2286
      %2404 = vst.msk [vmem:[%s331 + $0x60] sm:$0xff] %vm2391, %v2288
      %2405 = vst.msk [vmem:[%s331 + $0x68] sm:$0xff] %vm2391, %v2290
      %2406 = vst.msk [vmem:[%s331 + $0x70] sm:$0xff] %vm2391, %v2292
      %2407 = vst.msk [vmem:[%s331 + $0x78] sm:$0xff] %vm2391, %v2294
      %2408 = vst.msk [vmem:[%s331 + $0x80] sm:$0xff] %vm2391, %v2296
      %2409 = vst.msk [vmem:[%s331 + $0x88] sm:$0xff] %vm2391, %v2298
      %2410 = vst.msk [vmem:[%s331 + $0x90] sm:$0xff] %vm2391, %v2300
      %2411 = vst.msk [vmem:[%s331 + $0x98] sm:$0xff] %vm2391, %v2302
      %2412 = vst.msk [vmem:[%s331 + $0xa0] sm:$0xff] %vm2391, %v2304
      %2413 = vst.msk [vmem:[%s331 + $0xa8] sm:$0xff] %vm2391, %v2306
      %2414 = vst.msk [vmem:[%s331 + $0xb0] sm:$0xff] %vm2391, %v2308
      %2415 = vst.msk [vmem:[%s331 + $0xb8] sm:$0xff] %vm2391, %v2310
      %2416 = vst.msk [vmem:[%s331 + $0xc0] sm:$0xff] %vm2391, %v2312
      %2417 = vst.msk [vmem:[%s331 + $0xc8] sm:$0xff] %vm2391, %v2314
      %2418 = vst.msk [vmem:[%s331 + $0xd0] sm:$0xff] %vm2391, %v2316
      %2419 = vst.msk [vmem:[%s331 + $0xd8] sm:$0xff] %vm2391, %v2318
      %2420 = vst.msk [vmem:[%s331 + $0xe0] sm:$0xff] %vm2391, %v2320
      %2421 = vst.msk [vmem:[%s331 + $0xe8] sm:$0xff] %vm2391, %v2322
      %2422 = vst.msk [vmem:[%s331 + $0xf0] sm:$0xff] %vm2391, %v2324
      %2423 = vst.msk [vmem:[%s331 + $0xf8] sm:$0xff] %vm2391, %v2326
      %2424 = vst.msk [vmem:[%s331 + $0x100] sm:$0xff] %vm2391, %v2328
      %2425 = vst.msk [vmem:[%s331 + $0x108] sm:$0xff] %vm2391, %v2330
      %2426 = vst.msk [vmem:[%s331 + $0x110] sm:$0xff] %vm2391, %v2332
      %2427 = vst.msk [vmem:[%s331 + $0x118] sm:$0xff] %vm2391, %v2334
      %2428 = vst.msk [vmem:[%s331 + $0x120] sm:$0xff] %vm2391, %v2336
      %2429 = vst.msk [vmem:[%s331 + $0x128] sm:$0xff] %vm2391, %v2338
      %2430 = vst.msk [vmem:[%s331 + $0x130] sm:$0xff] %vm2391, %v2340
      %2431 = vst.msk [vmem:[%s331 + $0x138] sm:$0xff] %vm2391, %v2342
      %2432 = vst.msk [vmem:[%s331 + $0x140] sm:$0xff] %vm2391, %v2344
      %2433 = vst.msk [vmem:[%s331 + $0x148] sm:$0xff] %vm2391, %v2346
      %2434 = vst.msk [vmem:[%s331 + $0x150] sm:$0xff] %vm2391, %v2348
      %2435 = vst.msk [vmem:[%s331 + $0x158] sm:$0xff] %vm2391, %v2350
      %2436 = vst.msk [vmem:[%s331 + $0x160] sm:$0xff] %vm2391, %v2352
      %2437 = vst.msk [vmem:[%s331 + $0x168] sm:$0xff] %vm2391, %v2354
      %2438 = vst.msk [vmem:[%s331 + $0x170] sm:$0xff] %vm2391, %v2356
      %2439 = vst.msk [vmem:[%s331 + $0x178] sm:$0xff] %vm2391, %v2358
      %2440 = vst.msk [vmem:[%s331 + $0x180] sm:$0xff] %vm2391, %v2360
      %2441 = vst.msk [vmem:[%s331 + $0x188] sm:$0xff] %vm2391, %v2362
      %2442 = vst.msk [vmem:[%s331 + $0x190] sm:$0xff] %vm2391, %v2364
      %2443 = vst.msk [vmem:[%s331 + $0x198] sm:$0xff] %vm2391, %v2366
      %2444 = vst.msk [vmem:[%s331 + $0x1a0] sm:$0xff] %vm2391, %v2368
      %2445 = vst.msk [vmem:[%s331 + $0x1a8] sm:$0xff] %vm2391, %v2370
      %2446 = vst.msk [vmem:[%s331 + $0x1b0] sm:$0xff] %vm2391, %v2372
      %2447 = vst.msk [vmem:[%s331 + $0x1b8] sm:$0xff] %vm2391, %v2374
      %2448 = vst.msk [vmem:[%s331 + $0x1c0] sm:$0xff] %vm2391, %v2376
      %2449 = vst.msk [vmem:[%s331 + $0x1c8] sm:$0xff] %vm2391, %v2378
      %2450 = vst.msk [vmem:[%s331 + $0x1d0] sm:$0xff] %vm2391, %v2380
      %2451 = vst.msk [vmem:[%s331 + $0x1d8] sm:$0xff] %vm2391, %v2382
      %2452 = vst.msk [vmem:[%s331 + $0x1e0] sm:$0xff] %vm2391, %v2384
      %2453 = vst.msk [vmem:[%s331 + $0x1e8] sm:$0xff] %vm2391, %v2386
      %2454 = vst.msk [vmem:[%s331 + $0x1f0] sm:$0xff] %vm2391, %v2388
      %2455 = vst.msk [vmem:[%s331 + $0x1f8] sm:$0xff] %vm2391, %v2390
      %s2456 = smul.u32 64, %s21
      %p2457 = scmp.lt.s32.totalorder %s2456, 127
      %s2458 = scalar_select %p2457, %s2456, 127
      %s2459 = smul.addr %s2458, 8
      %s2460 = scalar_lea.vmem %s8, %s2459
      // Predicated region
      $region53: #{tpu_custom_call.1} parent=51 // pred_check
        %p2461 = pneg %p217
      $region54: #{tpu_custom_call.1} parent=51 // pred_check_branch
        %2463 = sbr.rel (%p2461) target = $region56
      $region55: #{tpu_custom_call.1} parent=51 // pred_region
        %s2464 = smul.u32 64, %s21
      $region56: #{tpu_custom_call.1} parent=51 // pred_fallthru
        _
    $region52: #{tpu_custom_call.1} parent=5 // pred_fallthru
      _
    %p2465 = scmp.le.s32.totalorder 2, %s16
    // Predicated region
    $region57: #{tpu_custom_call.1} parent=5 // pred_check
      %p2466 = pneg %p2465
    $region58: #{tpu_custom_call.1} parent=5 // pred_check_branch
      %2468 = sbr.rel (%p2466) target = $region60
    $region59: #{tpu_custom_call.1} parent=5 // pred_region
      %s2469 = ssub.s32 %s16, 2
      // Predicated region
      $region61: #{tpu_custom_call.1} parent=59 // pred_check
        %p2470 = pneg %p223
      $region62: #{tpu_custom_call.1} parent=59 // pred_check_branch
        %2472 = sbr.rel (%p2470) target = $region64
      $region63: #{tpu_custom_call.1} parent=59 // pred_region
        %s2473 = smul.u32 64, %s22
        %p2474 = scmp.lt.s32.totalorder %s2473, 127
        %s2475 = scalar_select %p2474, %s2473, 127
        %s2476 = smul.addr %s2475, 8
        %s2477 = scalar_lea.vmem %s8, %s2476
      $region64: #{tpu_custom_call.1} parent=59 // pred_fallthru
        _
    $region60: #{tpu_custom_call.1} parent=5 // pred_fallthru
      _
  $region6: #{tpu_custom_call.1} parent=0 // loop_footer
    %s20 = sadd.s32 1, %s16
  $region7: #{tpu_custom_call.1} parent=0 // loop_footer_branch
    %15 = sbr.rel target = $region3
  $region8: #{tpu_custom_call.1} parent=0 // loop_exit
    _

</llo_original>
